<compile_context>
chip_gen: v7x
topology: tpu7x:2x2x1
jax: 0.10.0
libtpu: 0.0.40
codegen_flags: <defaults>
</compile_context>

<pallas_src>
import jax
import jax.numpy as jnp
from jax import lax
from jax.experimental import pallas as pl
from jax.experimental.pallas import tpu as pltpu


def mlp_kernel(x_ref, w1_ref, b1_ref, w2_ref, b2_ref, w3_ref, b3_ref, o_ref):
    # Hoist all loop-invariant loads once per grid step.
    x = x_ref[...]            # (rows, 4*pack)    compute dtype (bf16 or f32)
    w1 = w1_ref[...]          # (4*pack, W*pack)  compute dtype
    b1 = b1_ref[...]          # (1, W*pack)       f32
    w2 = w2_ref[...]          # (W*pack, W*pack)  compute dtype
    b2 = b2_ref[...]          # (1, W*pack)       f32
    w3 = w3_ref[...]          # (W*pack, pack)    compute dtype
    b3 = b3_ref[0]            # scalar f32 from SMEM

    cdt = x.dtype

    # Layer 1 (packed): (rows, 4*pack) @ (4*pack, W*pack), f32 accumulation,
    # tanh in the compute dtype (bf16 EUP on v6e/v7x).
    h = jnp.tanh(
        (jnp.dot(x, w1, preferred_element_type=jnp.float32) + b1).astype(cdt)
    )

    # Hoist the bias broadcast out of the unrolled loop (no CSE in JAX, the
    # unrolled loop would otherwise stamp out 9 broadcast_in_dims).
    b2_full = jnp.broadcast_to(b2, h.shape)   # f32 (rows, W*pack)

    # 9 applications of the SAME (block-diagonal) layer-2 weights + tanh.
    def body(_, h):
        z = jnp.dot(h, w2, preferred_element_type=jnp.float32) + b2_full
        return jnp.tanh(z.astype(cdt))

    h = lax.fori_loop(0, 9, body, h, unroll=True)

    # Layer 3 (packed): block-structured w3 gives a lane-dense (rows, pack)
    # output block; per-sample scalar output ends up at column (sample % pack).
    o = jnp.dot(h, w3, preferred_element_type=jnp.float32) + b3
    o_ref[...] = o.astype(o_ref.dtype)


def sgd_neural_network_forward(
    x, params, *, tile_b=1024, pack=8, compute_dtype=jnp.bfloat16
):
    """x: (B, 4) float32. params: dict of (in, out) weights / 2-D biases.

    pack=8 fills the 256-wide MXU on v6e/v7x; use pack=4 on v5e.
    compute_dtype=jnp.bfloat16 for v6e/v7x (bf16 EUP/VPU); jnp.float32 on v5e.
    """
    w1, b1, w2, b2, w3, b3 = (
        params["w1"], params["b1"], params["w2"],
        params["b2"], params["w3"], params["b3"],
    )
    K = w1.shape[0]   # 4
    W = w1.shape[1]   # hidden width

    assert tile_b % pack == 0, "tile_b must be a multiple of pack"
    rows = tile_b // pack
    assert rows % 8 == 0, "tile_b / pack must be a multiple of 8 (sublane tile)"

    # --- Block-diagonal (lane-packed) weights: kron(I_pack, W) -------------
    eye = jnp.eye(pack, dtype=jnp.float32)
    w1_bd = jnp.kron(eye, w1).astype(compute_dtype)          # (K*pack, W*pack)
    w2_bd = jnp.kron(eye, w2).astype(compute_dtype)          # (W*pack, W*pack)
    w3_bd = jnp.kron(eye, w3).astype(compute_dtype)          # (W*pack, pack)
    b1_bd = jnp.tile(b1.reshape(1, W), (1, pack)).astype(jnp.float32)
    b2_bd = jnp.tile(b2.reshape(1, W), (1, pack)).astype(jnp.float32)
    b3_s = b3.reshape(1).astype(jnp.float32)                 # scalar -> SMEM

    # --- Pad batch to a multiple of tile_b and lane-pack the input ---------
    B = x.shape[0]
    n_tiles = pl.cdiv(B, tile_b)
    b_pad = n_tiles * tile_b
    if b_pad != B:
        x = jnp.pad(x, ((0, b_pad - B), (0, 0)))
    # Row-major reshape == concat of `pack` consecutive samples per row.
    x_packed = x.reshape(b_pad // pack, K * pack).astype(compute_dtype)

    const2d = lambda i: (0, 0)   # weights/biases stay VMEM-resident

    out = pl.pallas_call(
        mlp_kernel,
        out_shape=jax.ShapeDtypeStruct((b_pad // pack, pack), jnp.float32),
        grid=(n_tiles,),
        in_specs=[
            pl.BlockSpec((rows, K * pack), lambda i: (i, 0)),       # x (tiled)
            pl.BlockSpec((K * pack, W * pack), const2d),            # w1_bd
            pl.BlockSpec((1, W * pack), const2d),                   # b1_bd
            pl.BlockSpec((W * pack, W * pack), const2d),            # w2_bd
            pl.BlockSpec((1, W * pack), const2d),                   # b2_bd
            pl.BlockSpec((W * pack, pack), const2d),                # w3_bd
            pl.BlockSpec(memory_space=pltpu.MemorySpace.SMEM),      # b3 scalar
        ],
        out_specs=pl.BlockSpec((rows, pack), lambda i: (i, 0)),
        compiler_params=pltpu.CompilerParams(
            dimension_semantics=("parallel",),   # batch axis shards across TCs on v7x
        ),
    )(x_packed, w1_bd, b1_bd, w2_bd, b2_bd, w3_bd, b3_s)

    # (b_pad/pack, pack) -> (b_pad, 1); row-major order preserves batch order.
    return out.reshape(b_pad, 1)[:B]


def init_params(key, w):
    """Deterministic init mimicking PyTorch Linear default:
    U(-1/sqrt(fan_in), 1/sqrt(fan_in)). Weights stored as (in, out)."""
    ks = jax.random.split(key, 6)

    def uniform(k, shape, fan_in):
        bound = 1.0 / jnp.sqrt(jnp.float32(fan_in))
        return jax.random.uniform(
            k, shape, minval=-bound, maxval=bound, dtype=jnp.float32
        )

    return {
        "w1": uniform(ks[0], (4, w), 4),
        "b1": uniform(ks[1], (1, w), 4),
        "w2": uniform(ks[2], (w, w), w),
        "b2": uniform(ks[3], (1, w), w),
        "w3": uniform(ks[4], (w, 1), w),
        "b3": uniform(ks[5], (1, 1), w),
    }


def reference_forward(x, p):
    h = jnp.tanh(x @ p["w1"] + p["b1"])
    for _ in range(9):
        h = jnp.tanh(h @ p["w2"] + p["b2"])
    return h @ p["w3"] + p["b3"]


if __name__ == "__main__":
    key = jax.random.PRNGKey(0)
    k_x, k_p, k_x2 = jax.random.split(key, 3)

    W = 32       # hidden width `w` of the module
    B = 2048     # 2 grid tiles at tile_b=1024

    params = init_params(k_p, W)

    # Case 1: default path (bf16 compute, pack=8, tile_b=1024), divisible batch.
    x = jax.random.normal(k_x, (B, 4), dtype=jnp.float32)
    out = jax.block_until_ready(sgd_neural_network_forward(x, params))
    ref = reference_forward(x, params)
    assert out.shape == (B, 1)
    assert jnp.allclose(out, ref, atol=5e-2), float(jnp.max(jnp.abs(out - ref)))

    # Case 2: f32 / pack=4 path (v5e-style config), ragged batch exercising the
    # pad-and-slice tail.
    x2 = jax.random.normal(k_x2, (37, 4), dtype=jnp.float32)
    out2 = jax.block_until_ready(
        sgd_neural_network_forward(
            x2, params, tile_b=256, pack=4, compute_dtype=jnp.float32
        )
    )
    ref2 = reference_forward(x2, params)
    assert out2.shape == (37, 1)
    assert jnp.allclose(out2, ref2, atol=1e-4), float(jnp.max(jnp.abs(out2 - ref2)))

    print("KERNEL_OK")
</pallas_src>

<mosaic_0001>
module attributes {stable_mosaic.version = 11 : i64} {
  func.func @mlp_kernel(%arg0: i32, %arg1: memref<128x32xbf16, #tpu.memory_space<vmem>>, %arg2: memref<32x256xbf16, #tpu.memory_space<vmem>>, %arg3: memref<1x256xf32, #tpu.memory_space<vmem>>, %arg4: memref<256x256xbf16, #tpu.memory_space<vmem>>, %arg5: memref<1x256xf32, #tpu.memory_space<vmem>>, %arg6: memref<256x8xbf16, #tpu.memory_space<vmem>>, %arg7: memref<1xf32, #tpu.memory_space<smem>>, %arg8: memref<128x8xf32, #tpu.memory_space<vmem>>) attributes {dimension_semantics = [#tpu.dimension_semantics<parallel>], iteration_bounds = array<i64: 2>, scalar_prefetch = 0 : i64, scratch_operands = 0 : i64, tpu.core_type = #tpu.core_type<tc>, window_params = [{transform_indices = @transform_0, window_bounds = array<i64: 128, 32>}, {pipeline_mode = #tpu.pipeline_mode<synchronous>, transform_indices = @transform_1, window_bounds = array<i64: 32, 256>}, {pipeline_mode = #tpu.pipeline_mode<synchronous>, transform_indices = @transform_2, window_bounds = array<i64: 1, 256>}, {pipeline_mode = #tpu.pipeline_mode<synchronous>, transform_indices = @transform_3, window_bounds = array<i64: 256, 256>}, {pipeline_mode = #tpu.pipeline_mode<synchronous>, transform_indices = @transform_4, window_bounds = array<i64: 1, 256>}, {pipeline_mode = #tpu.pipeline_mode<synchronous>, transform_indices = @transform_5, window_bounds = array<i64: 256, 8>}, {transform_indices = @transform_6, window_bounds = array<i64: 1>}, {transform_indices = @transform_7, window_bounds = array<i64: 128, 8>}]} {
    %c0 = arith.constant 0 : index
    %c0_0 = arith.constant 0 : index
    %0 = vector.load %arg1[%c0, %c0_0] : memref<128x32xbf16, #tpu.memory_space<vmem>>, vector<128x32xbf16>
    %c0_1 = arith.constant 0 : index
    %c0_2 = arith.constant 0 : index
    %1 = vector.load %arg2[%c0_1, %c0_2] : memref<32x256xbf16, #tpu.memory_space<vmem>>, vector<32x256xbf16>
    %c0_3 = arith.constant 0 : index
    %c0_4 = arith.constant 0 : index
    %2 = vector.load %arg3[%c0_3, %c0_4] : memref<1x256xf32, #tpu.memory_space<vmem>>, vector<1x256xf32>
    %c0_5 = arith.constant 0 : index
    %c0_6 = arith.constant 0 : index
    %3 = vector.load %arg4[%c0_5, %c0_6] : memref<256x256xbf16, #tpu.memory_space<vmem>>, vector<256x256xbf16>
    %c0_7 = arith.constant 0 : index
    %c0_8 = arith.constant 0 : index
    %4 = vector.load %arg5[%c0_7, %c0_8] : memref<1x256xf32, #tpu.memory_space<vmem>>, vector<1x256xf32>
    %c0_9 = arith.constant 0 : index
    %c0_10 = arith.constant 0 : index
    %5 = vector.load %arg6[%c0_9, %c0_10] : memref<256x8xbf16, #tpu.memory_space<vmem>>, vector<256x8xbf16>
    %c0_11 = arith.constant 0 : index
    %6 = memref.load %arg7[%c0_11] : memref<1xf32, #tpu.memory_space<smem>>
    %cst = arith.constant dense<0.000000e+00> : vector<128x256xf32>
    %7 = tpu.matmul %0, %1, %cst {dimension_numbers = #tpu.dot_dimension_numbers<[1], [0], [0], [1], [0, 0, 1, 1], [], []>} : vector<128x32xbf16>, vector<32x256xbf16>, vector<128x256xf32> -> vector<128x256xf32>
    %8 = vector.broadcast %2 : vector<1x256xf32> to vector<128x256xf32>
    %9 = arith.addf %7, %8 : vector<128x256xf32>
    %10 = arith.truncf %9 : vector<128x256xf32> to vector<128x256xbf16>
    %11 = math.tanh %10 : vector<128x256xbf16>
    %12 = vector.shape_cast %4 : vector<1x256xf32> to vector<1x256xf32>
    %13 = vector.broadcast %12 : vector<1x256xf32> to vector<128x256xf32>
    %c0_i32 = arith.constant 0 : i32
    %cst_12 = arith.constant dense<0.000000e+00> : vector<128x256xf32>
    %14 = tpu.matmul %11, %3, %cst_12 {dimension_numbers = #tpu.dot_dimension_numbers<[1], [0], [0], [1], [0, 0, 1, 1], [], []>} : vector<128x256xbf16>, vector<256x256xbf16>, vector<128x256xf32> -> vector<128x256xf32>
    %15 = arith.addf %14, %13 : vector<128x256xf32>
    %16 = arith.truncf %15 : vector<128x256xf32> to vector<128x256xbf16>
    %17 = math.tanh %16 : vector<128x256xbf16>
    %c1_i32 = arith.constant 1 : i32
    %cst_13 = arith.constant dense<0.000000e+00> : vector<128x256xf32>
    %18 = tpu.matmul %17, %3, %cst_13 {dimension_numbers = #tpu.dot_dimension_numbers<[1], [0], [0], [1], [0, 0, 1, 1], [], []>} : vector<128x256xbf16>, vector<256x256xbf16>, vector<128x256xf32> -> vector<128x256xf32>
    %19 = arith.addf %18, %13 : vector<128x256xf32>
    %20 = arith.truncf %19 : vector<128x256xf32> to vector<128x256xbf16>
    %21 = math.tanh %20 : vector<128x256xbf16>
    %c2_i32 = arith.constant 2 : i32
    %cst_14 = arith.constant dense<0.000000e+00> : vector<128x256xf32>
    %22 = tpu.matmul %21, %3, %cst_14 {dimension_numbers = #tpu.dot_dimension_numbers<[1], [0], [0], [1], [0, 0, 1, 1], [], []>} : vector<128x256xbf16>, vector<256x256xbf16>, vector<128x256xf32> -> vector<128x256xf32>
    %23 = arith.addf %22, %13 : vector<128x256xf32>
    %24 = arith.truncf %23 : vector<128x256xf32> to vector<128x256xbf16>
    %25 = math.tanh %24 : vector<128x256xbf16>
    %c3_i32 = arith.constant 3 : i32
    %cst_15 = arith.constant dense<0.000000e+00> : vector<128x256xf32>
    %26 = tpu.matmul %25, %3, %cst_15 {dimension_numbers = #tpu.dot_dimension_numbers<[1], [0], [0], [1], [0, 0, 1, 1], [], []>} : vector<128x256xbf16>, vector<256x256xbf16>, vector<128x256xf32> -> vector<128x256xf32>
    %27 = arith.addf %26, %13 : vector<128x256xf32>
    %28 = arith.truncf %27 : vector<128x256xf32> to vector<128x256xbf16>
    %29 = math.tanh %28 : vector<128x256xbf16>
    %c4_i32 = arith.constant 4 : i32
    %cst_16 = arith.constant dense<0.000000e+00> : vector<128x256xf32>
    %30 = tpu.matmul %29, %3, %cst_16 {dimension_numbers = #tpu.dot_dimension_numbers<[1], [0], [0], [1], [0, 0, 1, 1], [], []>} : vector<128x256xbf16>, vector<256x256xbf16>, vector<128x256xf32> -> vector<128x256xf32>
    %31 = arith.addf %30, %13 : vector<128x256xf32>
    %32 = arith.truncf %31 : vector<128x256xf32> to vector<128x256xbf16>
    %33 = math.tanh %32 : vector<128x256xbf16>
    %c5_i32 = arith.constant 5 : i32
    %cst_17 = arith.constant dense<0.000000e+00> : vector<128x256xf32>
    %34 = tpu.matmul %33, %3, %cst_17 {dimension_numbers = #tpu.dot_dimension_numbers<[1], [0], [0], [1], [0, 0, 1, 1], [], []>} : vector<128x256xbf16>, vector<256x256xbf16>, vector<128x256xf32> -> vector<128x256xf32>
    %35 = arith.addf %34, %13 : vector<128x256xf32>
    %36 = arith.truncf %35 : vector<128x256xf32> to vector<128x256xbf16>
    %37 = math.tanh %36 : vector<128x256xbf16>
    %c6_i32 = arith.constant 6 : i32
    %cst_18 = arith.constant dense<0.000000e+00> : vector<128x256xf32>
    %38 = tpu.matmul %37, %3, %cst_18 {dimension_numbers = #tpu.dot_dimension_numbers<[1], [0], [0], [1], [0, 0, 1, 1], [], []>} : vector<128x256xbf16>, vector<256x256xbf16>, vector<128x256xf32> -> vector<128x256xf32>
    %39 = arith.addf %38, %13 : vector<128x256xf32>
    %40 = arith.truncf %39 : vector<128x256xf32> to vector<128x256xbf16>
    %41 = math.tanh %40 : vector<128x256xbf16>
    %c7_i32 = arith.constant 7 : i32
    %cst_19 = arith.constant dense<0.000000e+00> : vector<128x256xf32>
    %42 = tpu.matmul %41, %3, %cst_19 {dimension_numbers = #tpu.dot_dimension_numbers<[1], [0], [0], [1], [0, 0, 1, 1], [], []>} : vector<128x256xbf16>, vector<256x256xbf16>, vector<128x256xf32> -> vector<128x256xf32>
    %43 = arith.addf %42, %13 : vector<128x256xf32>
    %44 = arith.truncf %43 : vector<128x256xf32> to vector<128x256xbf16>
    %45 = math.tanh %44 : vector<128x256xbf16>
    %c8_i32 = arith.constant 8 : i32
    %cst_20 = arith.constant dense<0.000000e+00> : vector<128x256xf32>
    %46 = tpu.matmul %45, %3, %cst_20 {dimension_numbers = #tpu.dot_dimension_numbers<[1], [0], [0], [1], [0, 0, 1, 1], [], []>} : vector<128x256xbf16>, vector<256x256xbf16>, vector<128x256xf32> -> vector<128x256xf32>
    %47 = arith.addf %46, %13 : vector<128x256xf32>
    %48 = arith.truncf %47 : vector<128x256xf32> to vector<128x256xbf16>
    %49 = math.tanh %48 : vector<128x256xbf16>
    %cst_21 = arith.constant dense<0.000000e+00> : vector<128x8xf32>
    %50 = tpu.matmul %49, %5, %cst_21 {dimension_numbers = #tpu.dot_dimension_numbers<[1], [0], [0], [1], [0, 0, 1, 1], [], []>} : vector<128x256xbf16>, vector<256x8xbf16>, vector<128x8xf32> -> vector<128x8xf32>
    %51 = vector.broadcast %6 : f32 to vector<128x8xf32>
    %52 = arith.addf %50, %51 : vector<128x8xf32>
    %c0_22 = arith.constant 0 : index
    %c0_23 = arith.constant 0 : index
    %53 = vector.load %arg8[%c0_22, %c0_23] : memref<128x8xf32, #tpu.memory_space<vmem>>, vector<128x8xf32>
    tpu.vector_store %arg8[%c0_22, %c0_23], %52 {strides = array<i32>} : memref<128x8xf32, #tpu.memory_space<vmem>>, vector<128x8xf32>,
    return
  }
  func.func @transform_0(%arg0: i32) -> (i32, i32) {
    %c0_i32 = arith.constant 0 : i32
    %c0_i32_0 = arith.constant 0 : i32
    return %arg0, %c0_i32 : i32, i32
  }
  func.func @transform_1(%arg0: i32) -> (i32, i32) {
    %c0_i32 = arith.constant 0 : i32
    %c0_i32_0 = arith.constant 0 : i32
    %c0_i32_1 = arith.constant 0 : i32
    return %c0_i32, %c0_i32_0 : i32, i32
  }
  func.func @transform_2(%arg0: i32) -> (i32, i32) {
    %c0_i32 = arith.constant 0 : i32
    %c0_i32_0 = arith.constant 0 : i32
    %c0_i32_1 = arith.constant 0 : i32
    return %c0_i32, %c0_i32_0 : i32, i32
  }
  func.func @transform_3(%arg0: i32) -> (i32, i32) {
    %c0_i32 = arith.constant 0 : i32
    %c0_i32_0 = arith.constant 0 : i32
    %c0_i32_1 = arith.constant 0 : i32
    return %c0_i32, %c0_i32_0 : i32, i32
  }
  func.func @transform_4(%arg0: i32) -> (i32, i32) {
    %c0_i32 = arith.constant 0 : i32
    %c0_i32_0 = arith.constant 0 : i32
    %c0_i32_1 = arith.constant 0 : i32
    return %c0_i32, %c0_i32_0 : i32, i32
  }
  func.func @transform_5(%arg0: i32) -> (i32, i32) {
    %c0_i32 = arith.constant 0 : i32
    %c0_i32_0 = arith.constant 0 : i32
    %c0_i32_1 = arith.constant 0 : i32
    return %c0_i32, %c0_i32_0 : i32, i32
  }
  func.func @transform_6(%arg0: i32) -> i32 {
    %c0_i32 = arith.constant 0 : i32
    %c0_i32_0 = arith.constant 0 : i32
    return %c0_i32 : i32
  }
  func.func @transform_7(%arg0: i32) -> (i32, i32) {
    %c0_i32 = arith.constant 0 : i32
    %c0_i32_0 = arith.constant 0 : i32
    return %arg0, %c0_i32 : i32, i32
  }
}

</mosaic_0001>

<llo_original>
// kernel: tpu_custom_call.1
$region0: #{tpu_custom_call.1}
  #allocation0 [shape = 'u32[]', space=smem, size = 0x4, offset = 0x4, fixed_abs, tag = 'smem constant byte address 0x4 - core index']
  #allocation1 [shape = 'u32[144,128]{1,0:T(1,128)}', space=vmem, size = 0x12000, scoped, tag = 'internal scratch']
  #allocation2 [shape = 'f32[1]{0:T(128)S(6)}', space=smem, size = 0x200, scoped, tag = 'scoped memory for tpu_custom_call.1']
  %s0 = inlined_call_operand.vmem [shape: bf16[256,32], index: 0, kind: input, shape index: {}]
  %s1 = inlined_call_operand.vmem [shape: bf16[32,256], index: 1, kind: input, shape index: {}]
  %s2 = inlined_call_operand.vmem [shape: f32[1,256], index: 2, kind: input, shape index: {}]
  %s3 = inlined_call_operand.vmem [shape: bf16[256,256], index: 3, kind: input, shape index: {}]
  %s4 = inlined_call_operand.vmem [shape: f32[1,256], index: 4, kind: input, shape index: {}]
  %s5 = inlined_call_operand.vmem [shape: bf16[256,8], index: 5, kind: input, shape index: {}]
  %s6 = inlined_call_operand.<no memory space> [shape: f32[1], index: 6, kind: input, shape index: {}]
  %s7 = inlined_call_operand.vmem [shape: f32[256,8], index: 7, kind: output, shape index: {}]
  %s8 = sld [smem:[#allocation0]]
  $region61: #{tpu_custom_call.1} parent=0
    _
  %s10 = ssub.s32 1, %s8
  %s11 = scalar_select 0, %s10, %s8
  %12 = sst [smem:[#allocation2]] %s6
  loop: start=0, step=1, limit=4
  $region2: #{tpu_custom_call.1} parent=0 // loop_pre_header
    _
  $region3: #{tpu_custom_call.1} parent=0 // loop_header
    %s14 = sphi 0, %s18
    %p15 = scmp.ge.s32.totalorder %s14, 4
    %s24 = sphi 0, %s26
    %s27 = sphi 0, %s24
    %s28 = sphi 0, %s27
    %s44 = sphi 0, %s28
    %s48 = sphi 0, %s48
    %s50 = sphi 0, %s48
    %s51 = sphi 0, %s50
    %s65 = sphi 0, %s51
    %s69 = sphi 0, %s69
    %s71 = sphi 0, %s69
    %s72 = sphi 0, %s71
    %s86 = sphi 0, %s72
    %s90 = sphi 0, %s90
    %s92 = sphi 0, %s90
    %s93 = sphi 0, %s92
    %s107 = sphi 0, %s93
    %s111 = sphi 0, %s111
    %s113 = sphi 0, %s111
    %s114 = sphi 0, %s113
    %s128 = sphi 0, %s114
    %s132 = sphi 0, %s132
    %s134 = sphi 0, %s132
    %s135 = sphi 0, %s134
    %s149 = sphi 0, %s135
    %s153 = sphi 0, %s153
    %s155 = sphi 0, %s153
    %s156 = sphi 0, %s155
    %s170 = sphi 0, %s156
    %s176 = sphi 0, %s178
    %s179 = sphi 0, %s176
    %s180 = sphi 0, %s179
    %s196 = sphi 0, %s180
  $region4: #{tpu_custom_call.1} parent=0 // loop_header_branch
    %17 = sbr.rel (%p15) target = $region8
  $region5: #{tpu_custom_call.1} parent=0 // loop_body
    %s19 = ssub.s32 %s14, 1
    %s20 = ssub.s32 %s14, 2
    %s21 = sadd.s32 %s14, 1
    %s22 = ssub.s32 %s14, %s21
    %p23 = scmp.eq.s32.totalorder %s22, 0
    %s25 = sadd.s32 %s24, 1
    %s26 = scalar_select %p23, %s24, %s25
    %p29 = pneg %p23
    %p30 = scmp.eq.s32.totalorder %s14, 1
    %p31 = por %p29, %p30
    %p32 = scmp.ne.s32.totalorder %s24, %s27
    %p33 = scmp.eq.s32.totalorder %s14, 0
    %p34 = por %p32, %p33
    %p35 = scmp.ne.s32.totalorder %s24, %s27
    %p36 = scmp.eq.s32.totalorder %s19, 1
    %p37 = por %p35, %p36
    %p38 = scmp.ne.s32.totalorder %s27, %s28
    %p39 = scmp.eq.s32.totalorder %s19, 0
    %p40 = por %p38, %p39
    %p41 = scmp.ne.s32.totalorder %s27, %s28
    %p42 = scmp.eq.s32.totalorder %s20, 1
    %p43 = por %p41, %p42
    %p45 = scmp.ne.s32.totalorder %s28, %s44
    %p46 = scmp.eq.s32.totalorder %s20, 0
    %p47 = por %p45, %p46
    %s49 = sadd.s32 %s48, 1
    %p52 = scmp.eq.s32.totalorder %s14, 1
    %p53 = scmp.ne.s32.totalorder %s48, %s50
    %p54 = scmp.eq.s32.totalorder %s14, 0
    %p55 = por %p53, %p54
    %p56 = scmp.ne.s32.totalorder %s48, %s50
    %p57 = scmp.eq.s32.totalorder %s19, 1
    %p58 = por %p56, %p57
    %p59 = scmp.ne.s32.totalorder %s50, %s51
    %p60 = scmp.eq.s32.totalorder %s19, 0
    %p61 = por %p59, %p60
    %p62 = scmp.ne.s32.totalorder %s50, %s51
    %p63 = scmp.eq.s32.totalorder %s20, 1
    %p64 = por %p62, %p63
    %p66 = scmp.ne.s32.totalorder %s51, %s65
    %p67 = scmp.eq.s32.totalorder %s20, 0
    %p68 = por %p66, %p67
    %s70 = sadd.s32 %s69, 1
    %p73 = scmp.eq.s32.totalorder %s14, 1
    %p74 = scmp.ne.s32.totalorder %s69, %s71
    %p75 = scmp.eq.s32.totalorder %s14, 0
    %p76 = por %p74, %p75
    %p77 = scmp.ne.s32.totalorder %s69, %s71
    %p78 = scmp.eq.s32.totalorder %s19, 1
    %p79 = por %p77, %p78
    %p80 = scmp.ne.s32.totalorder %s71, %s72
    %p81 = scmp.eq.s32.totalorder %s19, 0
    %p82 = por %p80, %p81
    %p83 = scmp.ne.s32.totalorder %s71, %s72
    %p84 = scmp.eq.s32.totalorder %s20, 1
    %p85 = por %p83, %p84
    %p87 = scmp.ne.s32.totalorder %s72, %s86
    %p88 = scmp.eq.s32.totalorder %s20, 0
    %p89 = por %p87, %p88
    %s91 = sadd.s32 %s90, 1
    %p94 = scmp.eq.s32.totalorder %s14, 1
    %p95 = scmp.ne.s32.totalorder %s90, %s92
    %p96 = scmp.eq.s32.totalorder %s14, 0
    %p97 = por %p95, %p96
    %p98 = scmp.ne.s32.totalorder %s90, %s92
    %p99 = scmp.eq.s32.totalorder %s19, 1
    %p100 = por %p98, %p99
    %p101 = scmp.ne.s32.totalorder %s92, %s93
    %p102 = scmp.eq.s32.totalorder %s19, 0
    %p103 = por %p101, %p102
    %p104 = scmp.ne.s32.totalorder %s92, %s93
    %p105 = scmp.eq.s32.totalorder %s20, 1
    %p106 = por %p104, %p105
    %p108 = scmp.ne.s32.totalorder %s93, %s107
    %p109 = scmp.eq.s32.totalorder %s20, 0
    %p110 = por %p108, %p109
    %s112 = sadd.s32 %s111, 1
    %p115 = scmp.eq.s32.totalorder %s14, 1
    %p116 = scmp.ne.s32.totalorder %s111, %s113
    %p117 = scmp.eq.s32.totalorder %s14, 0
    %p118 = por %p116, %p117
    %p119 = scmp.ne.s32.totalorder %s111, %s113
    %p120 = scmp.eq.s32.totalorder %s19, 1
    %p121 = por %p119, %p120
    %p122 = scmp.ne.s32.totalorder %s113, %s114
    %p123 = scmp.eq.s32.totalorder %s19, 0
    %p124 = por %p122, %p123
    %p125 = scmp.ne.s32.totalorder %s113, %s114
    %p126 = scmp.eq.s32.totalorder %s20, 1
    %p127 = por %p125, %p126
    %p129 = scmp.ne.s32.totalorder %s114, %s128
    %p130 = scmp.eq.s32.totalorder %s20, 0
    %p131 = por %p129, %p130
    %s133 = sadd.s32 %s132, 1
    %p136 = scmp.eq.s32.totalorder %s14, 1
    %p137 = scmp.ne.s32.totalorder %s132, %s134
    %p138 = scmp.eq.s32.totalorder %s14, 0
    %p139 = por %p137, %p138
    %p140 = scmp.ne.s32.totalorder %s132, %s134
    %p141 = scmp.eq.s32.totalorder %s19, 1
    %p142 = por %p140, %p141
    %p143 = scmp.ne.s32.totalorder %s134, %s135
    %p144 = scmp.eq.s32.totalorder %s19, 0
    %p145 = por %p143, %p144
    %p146 = scmp.ne.s32.totalorder %s134, %s135
    %p147 = scmp.eq.s32.totalorder %s20, 1
    %p148 = por %p146, %p147
    %p150 = scmp.ne.s32.totalorder %s135, %s149
    %p151 = scmp.eq.s32.totalorder %s20, 0
    %p152 = por %p150, %p151
    %s154 = sadd.s32 %s153, 1
    %p157 = scmp.eq.s32.totalorder %s14, 1
    %p158 = scmp.ne.s32.totalorder %s153, %s155
    %p159 = scmp.eq.s32.totalorder %s14, 0
    %p160 = por %p158, %p159
    %p161 = scmp.ne.s32.totalorder %s153, %s155
    %p162 = scmp.eq.s32.totalorder %s19, 1
    %p163 = por %p161, %p162
    %p164 = scmp.ne.s32.totalorder %s155, %s156
    %p165 = scmp.eq.s32.totalorder %s19, 0
    %p166 = por %p164, %p165
    %p167 = scmp.ne.s32.totalorder %s155, %s156
    %p168 = scmp.eq.s32.totalorder %s20, 1
    %p169 = por %p167, %p168
    %p171 = scmp.ne.s32.totalorder %s156, %s170
    %p172 = scmp.eq.s32.totalorder %s20, 0
    %p173 = por %p171, %p172
    %s174 = ssub.s32 %s14, %s21
    %p175 = scmp.eq.s32.totalorder %s174, 0
    %s177 = sadd.s32 %s176, 1
    %s178 = scalar_select %p175, %s176, %s177
    %p181 = pneg %p175
    %p182 = scmp.eq.s32.totalorder %s14, 1
    %p183 = por %p181, %p182
    %p184 = scmp.ne.s32.totalorder %s176, %s179
    %p185 = scmp.eq.s32.totalorder %s14, 0
    %p186 = por %p184, %p185
    %p187 = scmp.ne.s32.totalorder %s176, %s179
    %p188 = scmp.eq.s32.totalorder %s19, 1
    %p189 = por %p187, %p188
    %p190 = scmp.ne.s32.totalorder %s179, %s180
    %p191 = scmp.eq.s32.totalorder %s19, 0
    %p192 = por %p190, %p191
    %p193 = scmp.ne.s32.totalorder %s179, %s180
    %p194 = scmp.eq.s32.totalorder %s20, 1
    %p195 = por %p193, %p194
    %p197 = scmp.ne.s32.totalorder %s180, %s196
    %p198 = scmp.eq.s32.totalorder %s20, 0
    %p199 = por %p197, %p198
    %p200 = scmp.le.s32.totalorder 1, %s14
    %p201 = scmp.lt.s32.totalorder %s14, 3
    %p202 = pnand %p200, %p201
    %p203 = pneg %p202
    // Predicated region
    $region9: #{tpu_custom_call.1} parent=5 // pred_check
      _
    $region10: #{tpu_custom_call.1} parent=5 // pred_check_branch
      %205 = sbr.rel (%p202) target = $region12
    $region11: #{tpu_custom_call.1} parent=5 // pred_region
      %s206 = ssub.s32 %s14, 1
      // Predicated region
      $region13: #{tpu_custom_call.1} parent=11 // pred_check
        %p207 = pneg %p61
      $region14: #{tpu_custom_call.1} parent=11 // pred_check_branch
        %209 = sbr.rel (%p207) target = $region16
      $region15: #{tpu_custom_call.1} parent=11 // pred_region
        _
      $region16: #{tpu_custom_call.1} parent=11 // pred_fallthru
        _
      // Predicated region
      $region17: #{tpu_custom_call.1} parent=11 // pred_check
        %p210 = pneg %p82
      $region18: #{tpu_custom_call.1} parent=11 // pred_check_branch
        %212 = sbr.rel (%p210) target = $region20
      $region19: #{tpu_custom_call.1} parent=11 // pred_region
        _
      $region20: #{tpu_custom_call.1} parent=11 // pred_fallthru
        _
      // Predicated region
      $region21: #{tpu_custom_call.1} parent=11 // pred_check
        %p213 = pneg %p103
      $region22: #{tpu_custom_call.1} parent=11 // pred_check_branch
        %215 = sbr.rel (%p213) target = $region24
      $region23: #{tpu_custom_call.1} parent=11 // pred_region
        _
      $region24: #{tpu_custom_call.1} parent=11 // pred_fallthru
        _
      // Predicated region
      $region25: #{tpu_custom_call.1} parent=11 // pred_check
        %p216 = pneg %p124
      $region26: #{tpu_custom_call.1} parent=11 // pred_check_branch
        %218 = sbr.rel (%p216) target = $region28
      $region27: #{tpu_custom_call.1} parent=11 // pred_region
        _
      $region28: #{tpu_custom_call.1} parent=11 // pred_fallthru
        _
      // Predicated region
      $region29: #{tpu_custom_call.1} parent=11 // pred_check
        %p219 = pneg %p145
      $region30: #{tpu_custom_call.1} parent=11 // pred_check_branch
        %221 = sbr.rel (%p219) target = $region32
      $region31: #{tpu_custom_call.1} parent=11 // pred_region
        _
      $region32: #{tpu_custom_call.1} parent=11 // pred_fallthru
        _
      // Predicated region
      $region33: #{tpu_custom_call.1} parent=11 // pred_check
        %p222 = pneg %p166
      $region34: #{tpu_custom_call.1} parent=11 // pred_check_branch
        %224 = sbr.rel (%p222) target = $region36
      $region35: #{tpu_custom_call.1} parent=11 // pred_region
        _
      $region36: #{tpu_custom_call.1} parent=11 // pred_fallthru
        _
    $region12: #{tpu_custom_call.1} parent=5 // pred_fallthru
      _
    %p225 = scmp.lt.s32.totalorder %s14, 2
    // Predicated region
    $region37: #{tpu_custom_call.1} parent=5 // pred_check
      %p226 = pneg %p225
    $region38: #{tpu_custom_call.1} parent=5 // pred_check_branch
      %228 = sbr.rel (%p226) target = $region40
    $region39: #{tpu_custom_call.1} parent=5 // pred_region
      // Predicated region
      $region41: #{tpu_custom_call.1} parent=39 // pred_check
        %p229 = pneg %p34
      $region42: #{tpu_custom_call.1} parent=39 // pred_check_branch
        %231 = sbr.rel (%p229) target = $region44
      $region43: #{tpu_custom_call.1} parent=39 // pred_region
        %s232 = smul.u32 16, %s14
        %p233 = scmp.lt.s32.totalorder %s232, 31
        %s234 = scalar_select %p233, %s232, 31
        %s235 = smul.addr %s234, 4
        %s236 = scalar_lea.vmem %s0, %s235
        %s237 = smul.u32 16, %s14
      $region44: #{tpu_custom_call.1} parent=39 // pred_fallthru
        _
    $region40: #{tpu_custom_call.1} parent=5 // pred_fallthru
      _
    %p238 = scmp.le.s32.totalorder 1, %s14
    %p239 = scmp.lt.s32.totalorder %s14, 3
    %p240 = pnand %p238, %p239
    %p241 = pneg %p240
    // Predicated region
    $region45: #{tpu_custom_call.1} parent=5 // pred_check
      _
    $region46: #{tpu_custom_call.1} parent=5 // pred_check_branch
      %243 = sbr.rel (%p240) target = $region48
    $region47: #{tpu_custom_call.1} parent=5 // pred_region
      %s244 = ssub.s32 %s14, 1
      %s245 = smul.u32 16, %s19
      %p246 = scmp.lt.s32.totalorder %s245, 31
      %s247 = scalar_select %p246, %s245, 31
      %s248 = smul.addr %s247, 4
      %s249 = scalar_lea.vmem %s0, %s248
      %p250 = pneg %p40
      %p251 = pneg %p37
      %p252 = pneg %p61
      %p253 = pneg %p58
      %p254 = pneg %p82
      %p255 = pneg %p79
      %p256 = pneg %p103
      %p257 = pneg %p100
      %p258 = pneg %p124
      %p259 = pneg %p121
      %p260 = pneg %p145
      %p261 = pneg %p142
      %p262 = pneg %p166
      %p263 = pneg %p163
      %p264 = pneg %p192
      %p265 = pneg %p189
      %s266 = smul.u32 16, %s19
      %p267 = scmp.lt.s32.totalorder %s266, 31
      %s268 = scalar_select %p267, %s266, 31
      %s269 = smul.addr %s268, 8
      %s270 = scalar_lea.vmem %s7, %s269
      %s271 = smul.u32 16, %s19
      %p272 = scmp.lt.s32.totalorder %s271, 31
      %s273 = scalar_select %p272, %s271, 31
      %s274 = smul.addr %s273, 4
      %s275 = scalar_lea.vmem %s0, %s274
      %s276 = smul.u32 16, %s19
      %s277 = smul.u32 16, %s19
      %p278 = scmp.lt.s32.totalorder %s277, 31
      %s279 = scalar_select %p278, %s277, 31
      %s280 = smul.addr %s279, 8
      %s281 = scalar_lea.vmem %s7, %s280
      %s282 = smul.u32 16, %s19
      %v284 = vld [vmem:[%s275] sm:$0xf]
      %v285 = vld [vmem:[%s275 + $0x4] sm:$0xf]
      %v286 = vld [vmem:[%s275 + $0x8] sm:$0xf]
      %v287 = vld [vmem:[%s275 + $0xc] sm:$0xf]
      %v288 = vld [vmem:[%s275 + $0x10] sm:$0xf]
      %v289 = vld [vmem:[%s275 + $0x14] sm:$0xf]
      %v290 = vld [vmem:[%s275 + $0x18] sm:$0xf]
      %v291 = vld [vmem:[%s275 + $0x1c] sm:$0xf]
      %v292 = vld [vmem:[%s275 + $0x20] sm:$0xf]
      %v293 = vld [vmem:[%s275 + $0x24] sm:$0xf]
      %v294 = vld [vmem:[%s275 + $0x28] sm:$0xf]
      %v295 = vld [vmem:[%s275 + $0x2c] sm:$0xf]
      %v296 = vld [vmem:[%s275 + $0x30] sm:$0xf]
      %v297 = vld [vmem:[%s275 + $0x34] sm:$0xf]
      %v298 = vld [vmem:[%s275 + $0x38] sm:$0xf]
      %v299 = vld [vmem:[%s275 + $0x3c] sm:$0xf]
      %v300 = vld [vmem:[%s1] sm:$0xff]
      %v301 = vld [vmem:[%s1 + $0x8] sm:$0xff]
      %v302 = vld [vmem:[%s1 + $0x10] sm:$0xff]
      %v303 = vld [vmem:[%s1 + $0x18] sm:$0xff]
      %v304 = vld [vmem:[%s2] sm:$0x3]
      %v305 = vld [vmem:[%s3] sm:$0xff]
      %v306 = vld [vmem:[%s3 + $0x8] sm:$0xff]
      %v307 = vld [vmem:[%s3 + $0x10] sm:$0xff]
      %v308 = vld [vmem:[%s3 + $0x18] sm:$0xff]
      %v309 = vld [vmem:[%s3 + $0x20] sm:$0xff]
      %v310 = vld [vmem:[%s3 + $0x28] sm:$0xff]
      %v311 = vld [vmem:[%s3 + $0x30] sm:$0xff]
      %v312 = vld [vmem:[%s3 + $0x38] sm:$0xff]
      %v313 = vld [vmem:[%s3 + $0x40] sm:$0xff]
      %v314 = vld [vmem:[%s3 + $0x48] sm:$0xff]
      %v315 = vld [vmem:[%s3 + $0x50] sm:$0xff]
      %v316 = vld [vmem:[%s3 + $0x58] sm:$0xff]
      %v317 = vld [vmem:[%s3 + $0x60] sm:$0xff]
      %v318 = vld [vmem:[%s3 + $0x68] sm:$0xff]
      %v319 = vld [vmem:[%s3 + $0x70] sm:$0xff]
      %v320 = vld [vmem:[%s3 + $0x78] sm:$0xff]
      %v321 = vld [vmem:[%s3 + $0x80] sm:$0xff]
      %v322 = vld [vmem:[%s3 + $0x88] sm:$0xff]
      %v323 = vld [vmem:[%s3 + $0x90] sm:$0xff]
      %v324 = vld [vmem:[%s3 + $0x98] sm:$0xff]
      %v325 = vld [vmem:[%s3 + $0xa0] sm:$0xff]
      %v326 = vld [vmem:[%s3 + $0xa8] sm:$0xff]
      %v327 = vld [vmem:[%s3 + $0xb0] sm:$0xff]
      %v328 = vld [vmem:[%s3 + $0xb8] sm:$0xff]
      %v329 = vld [vmem:[%s3 + $0xc0] sm:$0xff]
      %v330 = vld [vmem:[%s3 + $0xc8] sm:$0xff]
      %v331 = vld [vmem:[%s3 + $0xd0] sm:$0xff]
      %v332 = vld [vmem:[%s3 + $0xd8] sm:$0xff]
      %v333 = vld [vmem:[%s3 + $0xe0] sm:$0xff]
      %v334 = vld [vmem:[%s3 + $0xe8] sm:$0xff]
      %v335 = vld [vmem:[%s3 + $0xf0] sm:$0xff]
      %v336 = vld [vmem:[%s3 + $0xf8] sm:$0xff]
      %v337 = vld [vmem:[%s4] sm:$0x3]
      %v338 = vld [vmem:[%s5] sm:$0xf]
      %v339 = vld [vmem:[%s5 + $0x4] sm:$0xf]
      %v340 = vld [vmem:[%s5 + $0x8] sm:$0xf]
      %v341 = vld [vmem:[%s5 + $0xc] sm:$0xf]
      %v342 = vld [vmem:[%s5 + $0x10] sm:$0xf]
      %v343 = vld [vmem:[%s5 + $0x14] sm:$0xf]
      %v344 = vld [vmem:[%s5 + $0x18] sm:$0xf]
      %v345 = vld [vmem:[%s5 + $0x1c] sm:$0xf]
      %v346 = vld [vmem:[%s5 + $0x20] sm:$0xf]
      %v347 = vld [vmem:[%s5 + $0x24] sm:$0xf]
      %v348 = vld [vmem:[%s5 + $0x28] sm:$0xf]
      %v349 = vld [vmem:[%s5 + $0x2c] sm:$0xf]
      %v350 = vld [vmem:[%s5 + $0x30] sm:$0xf]
      %v351 = vld [vmem:[%s5 + $0x34] sm:$0xf]
      %v352 = vld [vmem:[%s5 + $0x38] sm:$0xf]
      %v353 = vld [vmem:[%s5 + $0x3c] sm:$0xf]
      %v354 = vld [vmem:[%s5 + $0x40] sm:$0xf]
      %v355 = vld [vmem:[%s5 + $0x44] sm:$0xf]
      %v356 = vld [vmem:[%s5 + $0x48] sm:$0xf]
      %v357 = vld [vmem:[%s5 + $0x4c] sm:$0xf]
      %v358 = vld [vmem:[%s5 + $0x50] sm:$0xf]
      %v359 = vld [vmem:[%s5 + $0x54] sm:$0xf]
      %v360 = vld [vmem:[%s5 + $0x58] sm:$0xf]
      %v361 = vld [vmem:[%s5 + $0x5c] sm:$0xf]
      %v362 = vld [vmem:[%s5 + $0x60] sm:$0xf]
      %v363 = vld [vmem:[%s5 + $0x64] sm:$0xf]
      %v364 = vld [vmem:[%s5 + $0x68] sm:$0xf]
      %v365 = vld [vmem:[%s5 + $0x6c] sm:$0xf]
      %v366 = vld [vmem:[%s5 + $0x70] sm:$0xf]
      %v367 = vld [vmem:[%s5 + $0x74] sm:$0xf]
      %v368 = vld [vmem:[%s5 + $0x78] sm:$0xf]
      %v369 = vld [vmem:[%s5 + $0x7c] sm:$0xf]
      %s370 = sld [smem:[#allocation2]]
      %v372 = vlaneseq
      %v373 = vshrl.u32 %v372, 7
      %v374 = vsub.s32 0, %v373
      %v375 = vrot.slane %v304, %v374
      %v376 = vlaneseq
      %v377 = vshrl.u32 %v376, 7
      %v378 = vsub.s32 1, %v377
      %v379 = vrot.slane %v304, %v378
      %v398 = vunpack.c.l.b16 %v284
      %v399 = vunpack.c.l.b16 %v285
      %v400 = vunpack.c.l.b16 %v286
      %v401 = vunpack.c.l.b16 %v287
      %v402 = vunpack.c.l.b16 %v288
      %v403 = vunpack.c.l.b16 %v289
      %v404 = vunpack.c.l.b16 %v290
      %v405 = vunpack.c.l.b16 %v291
      %v406 = vunpack.c.l.b16 %v292
      %v407 = vunpack.c.l.b16 %v293
      %v408 = vunpack.c.l.b16 %v294
      %v409 = vunpack.c.l.b16 %v295
      %v410 = vunpack.c.l.b16 %v296
      %v411 = vunpack.c.l.b16 %v297
      %v412 = vunpack.c.l.b16 %v298
      %v413 = vunpack.c.l.b16 %v299
      %v414 = vpack.c.b16 %v399, %v398
      %v415 = vpack.c.b16 %v401, %v400
      %v416 = vpack.c.b16 %v403, %v402
      %v417 = vpack.c.b16 %v405, %v404
      %v418 = vpack.c.b16 %v407, %v406
      %v419 = vpack.c.b16 %v409, %v408
      %v420 = vpack.c.b16 %v411, %v410
      %v421 = vpack.c.b16 %v413, %v412
      %v426 = vunpack.c.l.b16 %v300
      %v427 = vunpack.c.h.b16 %v300
      %v428 = vunpack.c.l.b16 %v301
      %v429 = vunpack.c.h.b16 %v301
      %v430 = vunpack.c.l.b16 %v302
      %v431 = vunpack.c.h.b16 %v302
      %v432 = vunpack.c.l.b16 %v303
      %v433 = vunpack.c.h.b16 %v303
      %v434 = vpack.c.b16 %v428, %v426
      %v435 = vpack.c.b16 %v429, %v427
      %v436 = vpack.c.b16 %v432, %v430
      %v437 = vpack.c.b16 %v433, %v431
      %vm442 = vcmask 261120
      %v444 = vsel %vm442, %v414, 0
      %v447 = vsel %vm442, %v415, 0
      %v450 = vsel %vm442, %v416, 0
      %v453 = vsel %vm442, %v417, 0
      %v456 = vsel %vm442, %v418, 0
      %v459 = vsel %vm442, %v419, 0
      %v462 = vsel %vm442, %v420, 0
      %v465 = vsel %vm442, %v421, 0
      %467 = vmatprep.subr.bf16.mxu0 %v435
      %468 = vmatpush1.bf16.msra.mxu0 %v434
      %469 = vmatprep.subr.bf16.mxu0 %v437
      %470 = vmatpush1.bf16.msra.mxu0 %v436
      %471 = vmatprep.subr.bf16.mxu0 0
      %472 = vmatpush1.bf16.msra.mxu0 0
      %473 = vmatprep.subr.bf16.mxu0 0
      %474 = vmatpush1.bf16.msra.mxu0 0
      %475 = vmatprep.subr.bf16.mxu0 0
      %476 = vmatpush1.bf16.msra.mxu0 0
      %477 = vmatprep.subr.bf16.mxu0 0
      %478 = vmatpush1.bf16.msra.mxu0 0
      %479 = vmatprep.subr.bf16.mxu0 0
      %480 = vmatpush1.bf16.msra.mxu0 0
      %481 = vmatprep.subr.bf16.mxu0 0
      %482 = vmatpush1.bf16.msra.mxu0 0
      %483 = vmatprep.subr.bf16.mxu0 0
      %484 = vmatpush1.bf16.msra.mxu0 0
      %485 = vmatprep.subr.bf16.mxu0 0
      %486 = vmatpush1.bf16.msra.mxu0 0
      %487 = vmatprep.subr.bf16.mxu0 0
      %488 = vmatpush1.bf16.msra.mxu0 0
      %489 = vmatprep.subr.bf16.mxu0 0
      %490 = vmatpush1.bf16.msra.mxu0 0
      %491 = vmatprep.subr.bf16.mxu0 0
      %492 = vmatpush1.bf16.msra.mxu0 0
      %493 = vmatprep.subr.bf16.mxu0 0
      %494 = vmatpush1.bf16.msra.mxu0 0
      %495 = vmatprep.subr.bf16.mxu0 0
      %496 = vmatpush1.bf16.msra.mxu0 0
      %497 = vmatprep.subr.bf16.mxu0 0
      %498 = vmatpush1.bf16.msra.mxu0 0
      %499 = vmatprep.mubr.bf16.mxu0 0
      %500 = vmatmul.mubr.bf16.gmra.mrb[0].mxu0 %v444
      %v501 = vpop.f32.mrb[0].mxu0
      %v502 = vadd.f32 %v375, %v501
      %v503 = vpop.f32.mrb[0].mxu0
      %v504 = vadd.f32 %v379, %v503
      %v505 = vpop.f32.mrb[0].mxu0
      %v506 = vadd.f32 %v375, %v505
      %v507 = vpop.f32.mrb[0].mxu0
      %v508 = vadd.f32 %v379, %v507
      %509 = vmatprep.mubr.bf16.mxu0 0
      %510 = vmatmul.mubr.bf16.gmra.mrb[0].mxu0 %v447
      %v511 = vpop.f32.mrb[0].mxu0
      %v512 = vadd.f32 %v375, %v511
      %v513 = vpop.f32.mrb[0].mxu0
      %v514 = vadd.f32 %v379, %v513
      %v515 = vpop.f32.mrb[0].mxu0
      %v516 = vadd.f32 %v375, %v515
      %v517 = vpop.f32.mrb[0].mxu0
      %v518 = vadd.f32 %v379, %v517
      %519 = vmatprep.mubr.bf16.mxu0 0
      %520 = vmatmul.mubr.bf16.gmra.mrb[0].mxu0 %v450
      %v521 = vpop.f32.mrb[0].mxu0
      %v522 = vadd.f32 %v375, %v521
      %v523 = vpop.f32.mrb[0].mxu0
      %v524 = vadd.f32 %v379, %v523
      %v525 = vpop.f32.mrb[0].mxu0
      %v526 = vadd.f32 %v375, %v525
      %v527 = vpop.f32.mrb[0].mxu0
      %v528 = vadd.f32 %v379, %v527
      %529 = vmatprep.mubr.bf16.mxu0 0
      %530 = vmatmul.mubr.bf16.gmra.mrb[0].mxu0 %v453
      %v531 = vpop.f32.mrb[0].mxu0
      %v532 = vadd.f32 %v375, %v531
      %v533 = vpop.f32.mrb[0].mxu0
      %v534 = vadd.f32 %v379, %v533
      %v535 = vpop.f32.mrb[0].mxu0
      %v536 = vadd.f32 %v375, %v535
      %v537 = vpop.f32.mrb[0].mxu0
      %v538 = vadd.f32 %v379, %v537
      %539 = vmatprep.mubr.bf16.mxu0 0
      %540 = vmatmul.mubr.bf16.gmra.mrb[0].mxu0 %v456
      %v541 = vpop.f32.mrb[0].mxu0
      %v542 = vadd.f32 %v375, %v541
      %v543 = vpop.f32.mrb[0].mxu0
      %v544 = vadd.f32 %v379, %v543
      %v545 = vpop.f32.mrb[0].mxu0
      %v546 = vadd.f32 %v375, %v545
      %v547 = vpop.f32.mrb[0].mxu0
      %v548 = vadd.f32 %v379, %v547
      %549 = vmatprep.mubr.bf16.mxu0 0
      %550 = vmatmul.mubr.bf16.gmra.mrb[0].mxu0 %v459
      %v551 = vpop.f32.mrb[0].mxu0
      %v552 = vadd.f32 %v375, %v551
      %v553 = vpop.f32.mrb[0].mxu0
      %v554 = vadd.f32 %v379, %v553
      %v555 = vpop.f32.mrb[0].mxu0
      %v556 = vadd.f32 %v375, %v555
      %v557 = vpop.f32.mrb[0].mxu0
      %v558 = vadd.f32 %v379, %v557
      %559 = vmatprep.mubr.bf16.mxu0 0
      %560 = vmatmul.mubr.bf16.gmra.mrb[0].mxu0 %v462
      %v561 = vpop.f32.mrb[0].mxu0
      %v562 = vadd.f32 %v375, %v561
      %v563 = vpop.f32.mrb[0].mxu0
      %v564 = vadd.f32 %v379, %v563
      %v565 = vpop.f32.mrb[0].mxu0
      %v566 = vadd.f32 %v375, %v565
      %v567 = vpop.f32.mrb[0].mxu0
      %v568 = vadd.f32 %v379, %v567
      %569 = vmatprep.mubr.bf16.mxu0 0
      %570 = vmatmul.mubr.bf16.gmra.mrb[0].mxu0 %v465
      %v571 = vpop.f32.mrb[0].mxu0
      %v572 = vadd.f32 %v375, %v571
      %v573 = vpop.f32.mrb[0].mxu0
      %v574 = vadd.f32 %v379, %v573
      %v575 = vpop.f32.mrb[0].mxu0
      %v576 = vadd.f32 %v375, %v575
      %v577 = vpop.f32.mrb[0].mxu0
      %v578 = vadd.f32 %v379, %v577
      %579 = vdwg.mxu0
      %v580 = vpack.c.bf16 %v506, %v502
      %v581 = vpack.c.bf16 %v508, %v504
      %v582 = vpack.c.bf16 %v516, %v512
      %v583 = vpack.c.bf16 %v518, %v514
      %v584 = vpack.c.bf16 %v526, %v522
      %v585 = vpack.c.bf16 %v528, %v524
      %v586 = vpack.c.bf16 %v536, %v532
      %v587 = vpack.c.bf16 %v538, %v534
      %v588 = vpack.c.bf16 %v546, %v542
      %v589 = vpack.c.bf16 %v548, %v544
      %v590 = vpack.c.bf16 %v556, %v552
      %v591 = vpack.c.bf16 %v558, %v554
      %v592 = vpack.c.bf16 %v566, %v562
      %v593 = vpack.c.bf16 %v568, %v564
      %v594 = vpack.c.bf16 %v576, %v572
      %v595 = vpack.c.bf16 %v578, %v574
      %v596 = vtanh.bf16.pop %v580
      %v597 = vtanh.bf16.pop %v581
      %v598 = vtanh.bf16.pop %v582
      %v599 = vtanh.bf16.pop %v583
      %v600 = vtanh.bf16.pop %v584
      %v601 = vtanh.bf16.pop %v585
      %v602 = vtanh.bf16.pop %v586
      %v603 = vtanh.bf16.pop %v587
      %v604 = vtanh.bf16.pop %v588
      %v605 = vtanh.bf16.pop %v589
      %v606 = vtanh.bf16.pop %v590
      %v607 = vtanh.bf16.pop %v591
      %v608 = vtanh.bf16.pop %v592
      %v609 = vtanh.bf16.pop %v593
      %v610 = vtanh.bf16.pop %v594
      %v611 = vtanh.bf16.pop %v595
      %v613 = vlaneseq
      %v614 = vshrl.u32 %v613, 7
      %v615 = vsub.s32 0, %v614
      %v616 = vrot.slane %v337, %v615
      %v617 = vlaneseq
      %v618 = vshrl.u32 %v617, 7
      %v619 = vsub.s32 1, %v618
      %v620 = vrot.slane %v337, %v619
      %v655 = vunpack.c.l.b16 %v305
      %v656 = vunpack.c.h.b16 %v305
      %v657 = vunpack.c.l.b16 %v306
      %v658 = vunpack.c.h.b16 %v306
      %v659 = vunpack.c.l.b16 %v307
      %v660 = vunpack.c.h.b16 %v307
      %v661 = vunpack.c.l.b16 %v308
      %v662 = vunpack.c.h.b16 %v308
      %v663 = vunpack.c.l.b16 %v309
      %v664 = vunpack.c.h.b16 %v309
      %v665 = vunpack.c.l.b16 %v310
      %v666 = vunpack.c.h.b16 %v310
      %v667 = vunpack.c.l.b16 %v311
      %v668 = vunpack.c.h.b16 %v311
      %v669 = vunpack.c.l.b16 %v312
      %v670 = vunpack.c.h.b16 %v312
      %v671 = vunpack.c.l.b16 %v313
      %v672 = vunpack.c.h.b16 %v313
      %v673 = vunpack.c.l.b16 %v314
      %v674 = vunpack.c.h.b16 %v314
      %v675 = vunpack.c.l.b16 %v315
      %v676 = vunpack.c.h.b16 %v315
      %v677 = vunpack.c.l.b16 %v316
      %v678 = vunpack.c.h.b16 %v316
      %v679 = vunpack.c.l.b16 %v317
      %v680 = vunpack.c.h.b16 %v317
      %v681 = vunpack.c.l.b16 %v318
      %v682 = vunpack.c.h.b16 %v318
      %v683 = vunpack.c.l.b16 %v319
      %v684 = vunpack.c.h.b16 %v319
      %v685 = vunpack.c.l.b16 %v320
      %v686 = vunpack.c.h.b16 %v320
      %v687 = vunpack.c.l.b16 %v321
      %v688 = vunpack.c.h.b16 %v321
      %v689 = vunpack.c.l.b16 %v322
      %v690 = vunpack.c.h.b16 %v322
      %v691 = vunpack.c.l.b16 %v323
      %v692 = vunpack.c.h.b16 %v323
      %v693 = vunpack.c.l.b16 %v324
      %v694 = vunpack.c.h.b16 %v324
      %v695 = vunpack.c.l.b16 %v325
      %v696 = vunpack.c.h.b16 %v325
      %v697 = vunpack.c.l.b16 %v326
      %v698 = vunpack.c.h.b16 %v326
      %v699 = vunpack.c.l.b16 %v327
      %v700 = vunpack.c.h.b16 %v327
      %v701 = vunpack.c.l.b16 %v328
      %v702 = vunpack.c.h.b16 %v328
      %v703 = vunpack.c.l.b16 %v329
      %v704 = vunpack.c.h.b16 %v329
      %v705 = vunpack.c.l.b16 %v330
      %v706 = vunpack.c.h.b16 %v330
      %v707 = vunpack.c.l.b16 %v331
      %v708 = vunpack.c.h.b16 %v331
      %v709 = vunpack.c.l.b16 %v332
      %v710 = vunpack.c.h.b16 %v332
      %v711 = vunpack.c.l.b16 %v333
      %v712 = vunpack.c.h.b16 %v333
      %v713 = vunpack.c.l.b16 %v334
      %v714 = vunpack.c.h.b16 %v334
      %v715 = vunpack.c.l.b16 %v335
      %v716 = vunpack.c.h.b16 %v335
      %v717 = vunpack.c.l.b16 %v336
      %v718 = vunpack.c.h.b16 %v336
      %v719 = vpack.c.b16 %v657, %v655
      %v720 = vpack.c.b16 %v658, %v656
      %v721 = vpack.c.b16 %v661, %v659
      %v722 = vpack.c.b16 %v662, %v660
      %v723 = vpack.c.b16 %v665, %v663
      %v724 = vpack.c.b16 %v666, %v664
      %v725 = vpack.c.b16 %v669, %v667
      %v726 = vpack.c.b16 %v670, %v668
      %v727 = vpack.c.b16 %v673, %v671
      %v728 = vpack.c.b16 %v674, %v672
      %v729 = vpack.c.b16 %v677, %v675
      %v730 = vpack.c.b16 %v678, %v676
      %v731 = vpack.c.b16 %v681, %v679
      %v732 = vpack.c.b16 %v682, %v680
      %v733 = vpack.c.b16 %v685, %v683
      %v734 = vpack.c.b16 %v686, %v684
      %v735 = vpack.c.b16 %v689, %v687
      %v736 = vpack.c.b16 %v690, %v688
      %v737 = vpack.c.b16 %v693, %v691
      %v738 = vpack.c.b16 %v694, %v692
      %v739 = vpack.c.b16 %v697, %v695
      %v740 = vpack.c.b16 %v698, %v696
      %v741 = vpack.c.b16 %v701, %v699
      %v742 = vpack.c.b16 %v702, %v700
      %v743 = vpack.c.b16 %v705, %v703
      %v744 = vpack.c.b16 %v706, %v704
      %v745 = vpack.c.b16 %v709, %v707
      %v746 = vpack.c.b16 %v710, %v708
      %v747 = vpack.c.b16 %v713, %v711
      %v748 = vpack.c.b16 %v714, %v712
      %v749 = vpack.c.b16 %v717, %v715
      %v750 = vpack.c.b16 %v718, %v716
      %783 = vmatprep.subr.bf16.mxu0 %v720
      %784 = vmatpush1.bf16.msra.mxu0 %v719
      %785 = vmatprep.subr.bf16.mxu0 %v722
      %786 = vmatpush1.bf16.msra.mxu0 %v721
      %787 = vmatprep.subr.bf16.mxu0 %v724
      %788 = vmatpush1.bf16.msra.mxu0 %v723
      %789 = vmatprep.subr.bf16.mxu0 %v726
      %790 = vmatpush1.bf16.msra.mxu0 %v725
      %791 = vmatprep.subr.bf16.mxu0 %v728
      %792 = vmatpush1.bf16.msra.mxu0 %v727
      %793 = vmatprep.subr.bf16.mxu0 %v730
      %794 = vmatpush1.bf16.msra.mxu0 %v729
      %795 = vmatprep.subr.bf16.mxu0 %v732
      %796 = vmatpush1.bf16.msra.mxu0 %v731
      %797 = vmatprep.subr.bf16.mxu0 %v734
      %798 = vmatpush1.bf16.msra.mxu0 %v733
      %799 = vmatprep.subr.bf16.mxu0 %v736
      %800 = vmatpush1.bf16.msra.mxu0 %v735
      %801 = vmatprep.subr.bf16.mxu0 %v738
      %802 = vmatpush1.bf16.msra.mxu0 %v737
      %803 = vmatprep.subr.bf16.mxu0 %v740
      %804 = vmatpush1.bf16.msra.mxu0 %v739
      %805 = vmatprep.subr.bf16.mxu0 %v742
      %806 = vmatpush1.bf16.msra.mxu0 %v741
      %807 = vmatprep.subr.bf16.mxu0 %v744
      %808 = vmatpush1.bf16.msra.mxu0 %v743
      %809 = vmatprep.subr.bf16.mxu0 %v746
      %810 = vmatpush1.bf16.msra.mxu0 %v745
      %811 = vmatprep.subr.bf16.mxu0 %v748
      %812 = vmatpush1.bf16.msra.mxu0 %v747
      %813 = vmatprep.subr.bf16.mxu0 %v750
      %814 = vmatpush1.bf16.msra.mxu0 %v749
      %815 = vmatprep.mubr.bf16.mxu0 %v597
      %816 = vmatmul.mubr.bf16.gmra.mrb[0].mxu0 %v596
      %v817 = vpop.f32.mrb[0].mxu0
      %v818 = vadd.f32 %v616, %v817
      %v819 = vpop.f32.mrb[0].mxu0
      %v820 = vadd.f32 %v620, %v819
      %v821 = vpop.f32.mrb[0].mxu0
      %v822 = vadd.f32 %v616, %v821
      %v823 = vpop.f32.mrb[0].mxu0
      %v824 = vadd.f32 %v620, %v823
      %825 = vmatprep.mubr.bf16.mxu0 %v599
      %826 = vmatmul.mubr.bf16.gmra.mrb[0].mxu0 %v598
      %v827 = vpop.f32.mrb[0].mxu0
      %v828 = vadd.f32 %v616, %v827
      %v829 = vpop.f32.mrb[0].mxu0
      %v830 = vadd.f32 %v620, %v829
      %v831 = vpop.f32.mrb[0].mxu0
      %v832 = vadd.f32 %v616, %v831
      %v833 = vpop.f32.mrb[0].mxu0
      %v834 = vadd.f32 %v620, %v833
      %835 = vmatprep.mubr.bf16.mxu0 %v601
      %836 = vmatmul.mubr.bf16.gmra.mrb[0].mxu0 %v600
      %v837 = vpop.f32.mrb[0].mxu0
      %v838 = vadd.f32 %v616, %v837
      %v839 = vpop.f32.mrb[0].mxu0
      %v840 = vadd.f32 %v620, %v839
      %v841 = vpop.f32.mrb[0].mxu0
      %v842 = vadd.f32 %v616, %v841
      %v843 = vpop.f32.mrb[0].mxu0
      %v844 = vadd.f32 %v620, %v843
      %845 = vmatprep.mubr.bf16.mxu0 %v603
      %846 = vmatmul.mubr.bf16.gmra.mrb[0].mxu0 %v602
      %v847 = vpop.f32.mrb[0].mxu0
      %v848 = vadd.f32 %v616, %v847
      %v849 = vpop.f32.mrb[0].mxu0
      %v850 = vadd.f32 %v620, %v849
      %v851 = vpop.f32.mrb[0].mxu0
      %v852 = vadd.f32 %v616, %v851
      %v853 = vpop.f32.mrb[0].mxu0
      %v854 = vadd.f32 %v620, %v853
      %855 = vmatprep.mubr.bf16.mxu0 %v605
      %856 = vmatmul.mubr.bf16.gmra.mrb[0].mxu0 %v604
      %v857 = vpop.f32.mrb[0].mxu0
      %v858 = vadd.f32 %v616, %v857
      %v859 = vpop.f32.mrb[0].mxu0
      %v860 = vadd.f32 %v620, %v859
      %v861 = vpop.f32.mrb[0].mxu0
      %v862 = vadd.f32 %v616, %v861
      %v863 = vpop.f32.mrb[0].mxu0
      %v864 = vadd.f32 %v620, %v863
      %865 = vmatprep.mubr.bf16.mxu0 %v607
      %866 = vmatmul.mubr.bf16.gmra.mrb[0].mxu0 %v606
      %v867 = vpop.f32.mrb[0].mxu0
      %v868 = vadd.f32 %v616, %v867
      %v869 = vpop.f32.mrb[0].mxu0
      %v870 = vadd.f32 %v620, %v869
      %v871 = vpop.f32.mrb[0].mxu0
      %v872 = vadd.f32 %v616, %v871
      %v873 = vpop.f32.mrb[0].mxu0
      %v874 = vadd.f32 %v620, %v873
      %875 = vmatprep.mubr.bf16.mxu0 %v609
      %876 = vmatmul.mubr.bf16.gmra.mrb[0].mxu0 %v608
      %v877 = vpop.f32.mrb[0].mxu0
      %v878 = vadd.f32 %v616, %v877
      %v879 = vpop.f32.mrb[0].mxu0
      %v880 = vadd.f32 %v620, %v879
      %v881 = vpop.f32.mrb[0].mxu0
      %v882 = vadd.f32 %v616, %v881
      %v883 = vpop.f32.mrb[0].mxu0
      %v884 = vadd.f32 %v620, %v883
      %885 = vmatprep.mubr.bf16.mxu0 %v611
      %886 = vmatmul.mubr.bf16.gmra.mrb[0].mxu0 %v610
      %v887 = vpop.f32.mrb[0].mxu0
      %v888 = vadd.f32 %v616, %v887
      %v889 = vpop.f32.mrb[0].mxu0
      %v890 = vadd.f32 %v620, %v889
      %v891 = vpop.f32.mrb[0].mxu0
      %v892 = vadd.f32 %v616, %v891
      %v893 = vpop.f32.mrb[0].mxu0
      %v894 = vadd.f32 %v620, %v893
      %895 = vdwg.mxu0
      %v896 = vpack.c.bf16 %v822, %v818
      %v897 = vpack.c.bf16 %v824, %v820
      %v898 = vpack.c.bf16 %v832, %v828
      %v899 = vpack.c.bf16 %v834, %v830
      %v900 = vpack.c.bf16 %v842, %v838
      %v901 = vpack.c.bf16 %v844, %v840
      %v902 = vpack.c.bf16 %v852, %v848
      %v903 = vpack.c.bf16 %v854, %v850
      %v904 = vpack.c.bf16 %v862, %v858
      %v905 = vpack.c.bf16 %v864, %v860
      %v906 = vpack.c.bf16 %v872, %v868
      %v907 = vpack.c.bf16 %v874, %v870
      %v908 = vpack.c.bf16 %v882, %v878
      %v909 = vpack.c.bf16 %v884, %v880
      %v910 = vpack.c.bf16 %v892, %v888
      %v911 = vpack.c.bf16 %v894, %v890
      %v912 = vtanh.bf16.pop %v896
      %v913 = vtanh.bf16.pop %v897
      %v914 = vtanh.bf16.pop %v898
      %v915 = vtanh.bf16.pop %v899
      %v916 = vtanh.bf16.pop %v900
      %v917 = vtanh.bf16.pop %v901
      %v918 = vtanh.bf16.pop %v902
      %v919 = vtanh.bf16.pop %v903
      %v920 = vtanh.bf16.pop %v904
      %v921 = vtanh.bf16.pop %v905
      %v922 = vtanh.bf16.pop %v906
      %v923 = vtanh.bf16.pop %v907
      %v924 = vtanh.bf16.pop %v908
      %v925 = vtanh.bf16.pop %v909
      %v926 = vtanh.bf16.pop %v910
      %v927 = vtanh.bf16.pop %v911
      %928 = vmatprep.subr.bf16.mxu0 %v720
      %929 = vmatpush1.bf16.msra.mxu0 %v719
      %930 = vmatprep.subr.bf16.mxu0 %v722
      %931 = vmatpush1.bf16.msra.mxu0 %v721
      %932 = vmatprep.subr.bf16.mxu0 %v724
      %933 = vmatpush1.bf16.msra.mxu0 %v723
      %934 = vmatprep.subr.bf16.mxu0 %v726
      %935 = vmatpush1.bf16.msra.mxu0 %v725
      %936 = vmatprep.subr.bf16.mxu0 %v728
      %937 = vmatpush1.bf16.msra.mxu0 %v727
      %938 = vmatprep.subr.bf16.mxu0 %v730
      %939 = vmatpush1.bf16.msra.mxu0 %v729
      %940 = vmatprep.subr.bf16.mxu0 %v732
      %941 = vmatpush1.bf16.msra.mxu0 %v731
      %942 = vmatprep.subr.bf16.mxu0 %v734
      %943 = vmatpush1.bf16.msra.mxu0 %v733
      %944 = vmatprep.subr.bf16.mxu0 %v736
      %945 = vmatpush1.bf16.msra.mxu0 %v735
      %946 = vmatprep.subr.bf16.mxu0 %v738
      %947 = vmatpush1.bf16.msra.mxu0 %v737
      %948 = vmatprep.subr.bf16.mxu0 %v740
      %949 = vmatpush1.bf16.msra.mxu0 %v739
      %950 = vmatprep.subr.bf16.mxu0 %v742
      %951 = vmatpush1.bf16.msra.mxu0 %v741
      %952 = vmatprep.subr.bf16.mxu0 %v744
      %953 = vmatpush1.bf16.msra.mxu0 %v743
      %954 = vmatprep.subr.bf16.mxu0 %v746
      %955 = vmatpush1.bf16.msra.mxu0 %v745
      %956 = vmatprep.subr.bf16.mxu0 %v748
      %957 = vmatpush1.bf16.msra.mxu0 %v747
      %958 = vmatprep.subr.bf16.mxu0 %v750
      %959 = vmatpush1.bf16.msra.mxu0 %v749
      %960 = vmatprep.mubr.bf16.mxu0 %v913
      %961 = vmatmul.mubr.bf16.gmra.mrb[0].mxu0 %v912
      %v962 = vpop.f32.mrb[0].mxu0
      %v963 = vadd.f32 %v616, %v962
      %v964 = vpop.f32.mrb[0].mxu0
      %v965 = vadd.f32 %v620, %v964
      %v966 = vpop.f32.mrb[0].mxu0
      %v967 = vadd.f32 %v616, %v966
      %v968 = vpop.f32.mrb[0].mxu0
      %v969 = vadd.f32 %v620, %v968
      %970 = vmatprep.mubr.bf16.mxu0 %v915
      %971 = vmatmul.mubr.bf16.gmra.mrb[0].mxu0 %v914
      %v972 = vpop.f32.mrb[0].mxu0
      %v973 = vadd.f32 %v616, %v972
      %v974 = vpop.f32.mrb[0].mxu0
      %v975 = vadd.f32 %v620, %v974
      %v976 = vpop.f32.mrb[0].mxu0
      %v977 = vadd.f32 %v616, %v976
      %v978 = vpop.f32.mrb[0].mxu0
      %v979 = vadd.f32 %v620, %v978
      %980 = vmatprep.mubr.bf16.mxu0 %v917
      %981 = vmatmul.mubr.bf16.gmra.mrb[0].mxu0 %v916
      %v982 = vpop.f32.mrb[0].mxu0
      %v983 = vadd.f32 %v616, %v982
      %v984 = vpop.f32.mrb[0].mxu0
      %v985 = vadd.f32 %v620, %v984
      %v986 = vpop.f32.mrb[0].mxu0
      %v987 = vadd.f32 %v616, %v986
      %v988 = vpop.f32.mrb[0].mxu0
      %v989 = vadd.f32 %v620, %v988
      %990 = vmatprep.mubr.bf16.mxu0 %v919
      %991 = vmatmul.mubr.bf16.gmra.mrb[0].mxu0 %v918
      %v992 = vpop.f32.mrb[0].mxu0
      %v993 = vadd.f32 %v616, %v992
      %v994 = vpop.f32.mrb[0].mxu0
      %v995 = vadd.f32 %v620, %v994
      %v996 = vpop.f32.mrb[0].mxu0
      %v997 = vadd.f32 %v616, %v996
      %v998 = vpop.f32.mrb[0].mxu0
      %v999 = vadd.f32 %v620, %v998
      %1000 = vmatprep.mubr.bf16.mxu0 %v921
      %1001 = vmatmul.mubr.bf16.gmra.mrb[0].mxu0 %v920
      %v1002 = vpop.f32.mrb[0].mxu0
      %v1003 = vadd.f32 %v616, %v1002
      %v1004 = vpop.f32.mrb[0].mxu0
      %v1005 = vadd.f32 %v620, %v1004
      %v1006 = vpop.f32.mrb[0].mxu0
      %v1007 = vadd.f32 %v616, %v1006
      %v1008 = vpop.f32.mrb[0].mxu0
      %v1009 = vadd.f32 %v620, %v1008
      %1010 = vmatprep.mubr.bf16.mxu0 %v923
      %1011 = vmatmul.mubr.bf16.gmra.mrb[0].mxu0 %v922
      %v1012 = vpop.f32.mrb[0].mxu0
      %v1013 = vadd.f32 %v616, %v1012
      %v1014 = vpop.f32.mrb[0].mxu0
      %v1015 = vadd.f32 %v620, %v1014
      %v1016 = vpop.f32.mrb[0].mxu0
      %v1017 = vadd.f32 %v616, %v1016
      %v1018 = vpop.f32.mrb[0].mxu0
      %v1019 = vadd.f32 %v620, %v1018
      %1020 = vmatprep.mubr.bf16.mxu0 %v925
      %1021 = vmatmul.mubr.bf16.gmra.mrb[0].mxu0 %v924
      %v1022 = vpop.f32.mrb[0].mxu0
      %v1023 = vadd.f32 %v616, %v1022
      %v1024 = vpop.f32.mrb[0].mxu0
      %v1025 = vadd.f32 %v620, %v1024
      %v1026 = vpop.f32.mrb[0].mxu0
      %v1027 = vadd.f32 %v616, %v1026
      %v1028 = vpop.f32.mrb[0].mxu0
      %v1029 = vadd.f32 %v620, %v1028
      %1030 = vmatprep.mubr.bf16.mxu0 %v927
      %1031 = vmatmul.mubr.bf16.gmra.mrb[0].mxu0 %v926
      %v1032 = vpop.f32.mrb[0].mxu0
      %v1033 = vadd.f32 %v616, %v1032
      %v1034 = vpop.f32.mrb[0].mxu0
      %v1035 = vadd.f32 %v620, %v1034
      %v1036 = vpop.f32.mrb[0].mxu0
      %v1037 = vadd.f32 %v616, %v1036
      %v1038 = vpop.f32.mrb[0].mxu0
      %v1039 = vadd.f32 %v620, %v1038
      %1040 = vdwg.mxu0
      %v1041 = vpack.c.bf16 %v967, %v963
      %v1042 = vpack.c.bf16 %v969, %v965
      %v1043 = vpack.c.bf16 %v977, %v973
      %v1044 = vpack.c.bf16 %v979, %v975
      %v1045 = vpack.c.bf16 %v987, %v983
      %v1046 = vpack.c.bf16 %v989, %v985
      %v1047 = vpack.c.bf16 %v997, %v993
      %v1048 = vpack.c.bf16 %v999, %v995
      %v1049 = vpack.c.bf16 %v1007, %v1003
      %v1050 = vpack.c.bf16 %v1009, %v1005
      %v1051 = vpack.c.bf16 %v1017, %v1013
      %v1052 = vpack.c.bf16 %v1019, %v1015
      %v1053 = vpack.c.bf16 %v1027, %v1023
      %v1054 = vpack.c.bf16 %v1029, %v1025
      %v1055 = vpack.c.bf16 %v1037, %v1033
      %v1056 = vpack.c.bf16 %v1039, %v1035
      %v1057 = vtanh.bf16.pop %v1041
      %v1058 = vtanh.bf16.pop %v1042
      %v1059 = vtanh.bf16.pop %v1043
      %v1060 = vtanh.bf16.pop %v1044
      %v1061 = vtanh.bf16.pop %v1045
      %v1062 = vtanh.bf16.pop %v1046
      %v1063 = vtanh.bf16.pop %v1047
      %v1064 = vtanh.bf16.pop %v1048
      %v1065 = vtanh.bf16.pop %v1049
      %v1066 = vtanh.bf16.pop %v1050
      %v1067 = vtanh.bf16.pop %v1051
      %v1068 = vtanh.bf16.pop %v1052
      %v1069 = vtanh.bf16.pop %v1053
      %v1070 = vtanh.bf16.pop %v1054
      %v1071 = vtanh.bf16.pop %v1055
      %v1072 = vtanh.bf16.pop %v1056
      %1073 = vmatprep.subr.bf16.mxu0 %v720
      %1074 = vmatpush1.bf16.msra.mxu0 %v719
      %1075 = vmatprep.subr.bf16.mxu0 %v722
      %1076 = vmatpush1.bf16.msra.mxu0 %v721
      %1077 = vmatprep.subr.bf16.mxu0 %v724
      %1078 = vmatpush1.bf16.msra.mxu0 %v723
      %1079 = vmatprep.subr.bf16.mxu0 %v726
      %1080 = vmatpush1.bf16.msra.mxu0 %v725
      %1081 = vmatprep.subr.bf16.mxu0 %v728
      %1082 = vmatpush1.bf16.msra.mxu0 %v727
      %1083 = vmatprep.subr.bf16.mxu0 %v730
      %1084 = vmatpush1.bf16.msra.mxu0 %v729
      %1085 = vmatprep.subr.bf16.mxu0 %v732
      %1086 = vmatpush1.bf16.msra.mxu0 %v731
      %1087 = vmatprep.subr.bf16.mxu0 %v734
      %1088 = vmatpush1.bf16.msra.mxu0 %v733
      %1089 = vmatprep.subr.bf16.mxu0 %v736
      %1090 = vmatpush1.bf16.msra.mxu0 %v735
      %1091 = vmatprep.subr.bf16.mxu0 %v738
      %1092 = vmatpush1.bf16.msra.mxu0 %v737
      %1093 = vmatprep.subr.bf16.mxu0 %v740
      %1094 = vmatpush1.bf16.msra.mxu0 %v739
      %1095 = vmatprep.subr.bf16.mxu0 %v742
      %1096 = vmatpush1.bf16.msra.mxu0 %v741
      %1097 = vmatprep.subr.bf16.mxu0 %v744
      %1098 = vmatpush1.bf16.msra.mxu0 %v743
      %1099 = vmatprep.subr.bf16.mxu0 %v746
      %1100 = vmatpush1.bf16.msra.mxu0 %v745
      %1101 = vmatprep.subr.bf16.mxu0 %v748
      %1102 = vmatpush1.bf16.msra.mxu0 %v747
      %1103 = vmatprep.subr.bf16.mxu0 %v750
      %1104 = vmatpush1.bf16.msra.mxu0 %v749
      %1105 = vmatprep.mubr.bf16.mxu0 %v1058
      %1106 = vmatmul.mubr.bf16.gmra.mrb[0].mxu0 %v1057
      %v1107 = vpop.f32.mrb[0].mxu0
      %v1108 = vadd.f32 %v616, %v1107
      %v1109 = vpop.f32.mrb[0].mxu0
      %v1110 = vadd.f32 %v620, %v1109
      %v1111 = vpop.f32.mrb[0].mxu0
      %v1112 = vadd.f32 %v616, %v1111
      %v1113 = vpop.f32.mrb[0].mxu0
      %v1114 = vadd.f32 %v620, %v1113
      %1115 = vmatprep.mubr.bf16.mxu0 %v1060
      %1116 = vmatmul.mubr.bf16.gmra.mrb[0].mxu0 %v1059
      %v1117 = vpop.f32.mrb[0].mxu0
      %v1118 = vadd.f32 %v616, %v1117
      %v1119 = vpop.f32.mrb[0].mxu0
      %v1120 = vadd.f32 %v620, %v1119
      %v1121 = vpop.f32.mrb[0].mxu0
      %v1122 = vadd.f32 %v616, %v1121
      %v1123 = vpop.f32.mrb[0].mxu0
      %v1124 = vadd.f32 %v620, %v1123
      %1125 = vmatprep.mubr.bf16.mxu0 %v1062
      %1126 = vmatmul.mubr.bf16.gmra.mrb[0].mxu0 %v1061
      %v1127 = vpop.f32.mrb[0].mxu0
      %v1128 = vadd.f32 %v616, %v1127
      %v1129 = vpop.f32.mrb[0].mxu0
      %v1130 = vadd.f32 %v620, %v1129
      %v1131 = vpop.f32.mrb[0].mxu0
      %v1132 = vadd.f32 %v616, %v1131
      %v1133 = vpop.f32.mrb[0].mxu0
      %v1134 = vadd.f32 %v620, %v1133
      %1135 = vmatprep.mubr.bf16.mxu0 %v1064
      %1136 = vmatmul.mubr.bf16.gmra.mrb[0].mxu0 %v1063
      %v1137 = vpop.f32.mrb[0].mxu0
      %v1138 = vadd.f32 %v616, %v1137
      %v1139 = vpop.f32.mrb[0].mxu0
      %v1140 = vadd.f32 %v620, %v1139
      %v1141 = vpop.f32.mrb[0].mxu0
      %v1142 = vadd.f32 %v616, %v1141
      %v1143 = vpop.f32.mrb[0].mxu0
      %v1144 = vadd.f32 %v620, %v1143
      %1145 = vmatprep.mubr.bf16.mxu0 %v1066
      %1146 = vmatmul.mubr.bf16.gmra.mrb[0].mxu0 %v1065
      %v1147 = vpop.f32.mrb[0].mxu0
      %v1148 = vadd.f32 %v616, %v1147
      %v1149 = vpop.f32.mrb[0].mxu0
      %v1150 = vadd.f32 %v620, %v1149
      %v1151 = vpop.f32.mrb[0].mxu0
      %v1152 = vadd.f32 %v616, %v1151
      %v1153 = vpop.f32.mrb[0].mxu0
      %v1154 = vadd.f32 %v620, %v1153
      %1155 = vmatprep.mubr.bf16.mxu0 %v1068
      %1156 = vmatmul.mubr.bf16.gmra.mrb[0].mxu0 %v1067
      %v1157 = vpop.f32.mrb[0].mxu0
      %v1158 = vadd.f32 %v616, %v1157
      %v1159 = vpop.f32.mrb[0].mxu0
      %v1160 = vadd.f32 %v620, %v1159
      %v1161 = vpop.f32.mrb[0].mxu0
      %v1162 = vadd.f32 %v616, %v1161
      %v1163 = vpop.f32.mrb[0].mxu0
      %v1164 = vadd.f32 %v620, %v1163
      %1165 = vmatprep.mubr.bf16.mxu0 %v1070
      %1166 = vmatmul.mubr.bf16.gmra.mrb[0].mxu0 %v1069
      %v1167 = vpop.f32.mrb[0].mxu0
      %v1168 = vadd.f32 %v616, %v1167
      %v1169 = vpop.f32.mrb[0].mxu0
      %v1170 = vadd.f32 %v620, %v1169
      %v1171 = vpop.f32.mrb[0].mxu0
      %v1172 = vadd.f32 %v616, %v1171
      %v1173 = vpop.f32.mrb[0].mxu0
      %v1174 = vadd.f32 %v620, %v1173
      %1175 = vmatprep.mubr.bf16.mxu0 %v1072
      %1176 = vmatmul.mubr.bf16.gmra.mrb[0].mxu0 %v1071
      %v1177 = vpop.f32.mrb[0].mxu0
      %v1178 = vadd.f32 %v616, %v1177
      %v1179 = vpop.f32.mrb[0].mxu0
      %v1180 = vadd.f32 %v620, %v1179
      %v1181 = vpop.f32.mrb[0].mxu0
      %v1182 = vadd.f32 %v616, %v1181
      %v1183 = vpop.f32.mrb[0].mxu0
      %v1184 = vadd.f32 %v620, %v1183
      %1185 = vdwg.mxu0
      %v1186 = vpack.c.bf16 %v1112, %v1108
      %v1187 = vpack.c.bf16 %v1114, %v1110
      %v1188 = vpack.c.bf16 %v1122, %v1118
      %v1189 = vpack.c.bf16 %v1124, %v1120
      %v1190 = vpack.c.bf16 %v1132, %v1128
      %v1191 = vpack.c.bf16 %v1134, %v1130
      %v1192 = vpack.c.bf16 %v1142, %v1138
      %v1193 = vpack.c.bf16 %v1144, %v1140
      %v1194 = vpack.c.bf16 %v1152, %v1148
      %v1195 = vpack.c.bf16 %v1154, %v1150
      %v1196 = vpack.c.bf16 %v1162, %v1158
      %v1197 = vpack.c.bf16 %v1164, %v1160
      %v1198 = vpack.c.bf16 %v1172, %v1168
      %v1199 = vpack.c.bf16 %v1174, %v1170
      %v1200 = vpack.c.bf16 %v1182, %v1178
      %v1201 = vpack.c.bf16 %v1184, %v1180
      %v1202 = vtanh.bf16.pop %v1186
      %v1203 = vtanh.bf16.pop %v1187
      %v1204 = vtanh.bf16.pop %v1188
      %v1205 = vtanh.bf16.pop %v1189
      %v1206 = vtanh.bf16.pop %v1190
      %v1207 = vtanh.bf16.pop %v1191
      %v1208 = vtanh.bf16.pop %v1192
      %v1209 = vtanh.bf16.pop %v1193
      %v1210 = vtanh.bf16.pop %v1194
      %v1211 = vtanh.bf16.pop %v1195
      %v1212 = vtanh.bf16.pop %v1196
      %v1213 = vtanh.bf16.pop %v1197
      %v1214 = vtanh.bf16.pop %v1198
      %v1215 = vtanh.bf16.pop %v1199
      %v1216 = vtanh.bf16.pop %v1200
      %v1217 = vtanh.bf16.pop %v1201
      %1218 = vmatprep.subr.bf16.mxu0 %v720
      %1219 = vmatpush1.bf16.msra.mxu0 %v719
      %1220 = vmatprep.subr.bf16.mxu0 %v722
      %1221 = vmatpush1.bf16.msra.mxu0 %v721
      %1222 = vmatprep.subr.bf16.mxu0 %v724
      %1223 = vmatpush1.bf16.msra.mxu0 %v723
      %1224 = vmatprep.subr.bf16.mxu0 %v726
      %1225 = vmatpush1.bf16.msra.mxu0 %v725
      %1226 = vmatprep.subr.bf16.mxu0 %v728
      %1227 = vmatpush1.bf16.msra.mxu0 %v727
      %1228 = vmatprep.subr.bf16.mxu0 %v730
      %1229 = vmatpush1.bf16.msra.mxu0 %v729
      %1230 = vmatprep.subr.bf16.mxu0 %v732
      %1231 = vmatpush1.bf16.msra.mxu0 %v731
      %1232 = vmatprep.subr.bf16.mxu0 %v734
      %1233 = vmatpush1.bf16.msra.mxu0 %v733
      %1234 = vmatprep.subr.bf16.mxu0 %v736
      %1235 = vmatpush1.bf16.msra.mxu0 %v735
      %1236 = vmatprep.subr.bf16.mxu0 %v738
      %1237 = vmatpush1.bf16.msra.mxu0 %v737
      %1238 = vmatprep.subr.bf16.mxu0 %v740
      %1239 = vmatpush1.bf16.msra.mxu0 %v739
      %1240 = vmatprep.subr.bf16.mxu0 %v742
      %1241 = vmatpush1.bf16.msra.mxu0 %v741
      %1242 = vmatprep.subr.bf16.mxu0 %v744
      %1243 = vmatpush1.bf16.msra.mxu0 %v743
      %1244 = vmatprep.subr.bf16.mxu0 %v746
      %1245 = vmatpush1.bf16.msra.mxu0 %v745
      %1246 = vmatprep.subr.bf16.mxu0 %v748
      %1247 = vmatpush1.bf16.msra.mxu0 %v747
      %1248 = vmatprep.subr.bf16.mxu0 %v750
      %1249 = vmatpush1.bf16.msra.mxu0 %v749
      %1250 = vmatprep.mubr.bf16.mxu0 %v1203
      %1251 = vmatmul.mubr.bf16.gmra.mrb[0].mxu0 %v1202
      %v1252 = vpop.f32.mrb[0].mxu0
      %v1253 = vadd.f32 %v616, %v1252
      %v1254 = vpop.f32.mrb[0].mxu0
      %v1255 = vadd.f32 %v620, %v1254
      %v1256 = vpop.f32.mrb[0].mxu0
      %v1257 = vadd.f32 %v616, %v1256
      %v1258 = vpop.f32.mrb[0].mxu0
      %v1259 = vadd.f32 %v620, %v1258
      %1260 = vmatprep.mubr.bf16.mxu0 %v1205
      %1261 = vmatmul.mubr.bf16.gmra.mrb[0].mxu0 %v1204
      %v1262 = vpop.f32.mrb[0].mxu0
      %v1263 = vadd.f32 %v616, %v1262
      %v1264 = vpop.f32.mrb[0].mxu0
      %v1265 = vadd.f32 %v620, %v1264
      %v1266 = vpop.f32.mrb[0].mxu0
      %v1267 = vadd.f32 %v616, %v1266
      %v1268 = vpop.f32.mrb[0].mxu0
      %v1269 = vadd.f32 %v620, %v1268
      %1270 = vmatprep.mubr.bf16.mxu0 %v1207
      %1271 = vmatmul.mubr.bf16.gmra.mrb[0].mxu0 %v1206
      %v1272 = vpop.f32.mrb[0].mxu0
      %v1273 = vadd.f32 %v616, %v1272
      %v1274 = vpop.f32.mrb[0].mxu0
      %v1275 = vadd.f32 %v620, %v1274
      %v1276 = vpop.f32.mrb[0].mxu0
      %v1277 = vadd.f32 %v616, %v1276
      %v1278 = vpop.f32.mrb[0].mxu0
      %v1279 = vadd.f32 %v620, %v1278
      %1280 = vmatprep.mubr.bf16.mxu0 %v1209
      %1281 = vmatmul.mubr.bf16.gmra.mrb[0].mxu0 %v1208
      %v1282 = vpop.f32.mrb[0].mxu0
      %v1283 = vadd.f32 %v616, %v1282
      %v1284 = vpop.f32.mrb[0].mxu0
      %v1285 = vadd.f32 %v620, %v1284
      %v1286 = vpop.f32.mrb[0].mxu0
      %v1287 = vadd.f32 %v616, %v1286
      %v1288 = vpop.f32.mrb[0].mxu0
      %v1289 = vadd.f32 %v620, %v1288
      %1290 = vmatprep.mubr.bf16.mxu0 %v1211
      %1291 = vmatmul.mubr.bf16.gmra.mrb[0].mxu0 %v1210
      %v1292 = vpop.f32.mrb[0].mxu0
      %v1293 = vadd.f32 %v616, %v1292
      %v1294 = vpop.f32.mrb[0].mxu0
      %v1295 = vadd.f32 %v620, %v1294
      %v1296 = vpop.f32.mrb[0].mxu0
      %v1297 = vadd.f32 %v616, %v1296
      %v1298 = vpop.f32.mrb[0].mxu0
      %v1299 = vadd.f32 %v620, %v1298
      %1300 = vmatprep.mubr.bf16.mxu0 %v1213
      %1301 = vmatmul.mubr.bf16.gmra.mrb[0].mxu0 %v1212
      %v1302 = vpop.f32.mrb[0].mxu0
      %v1303 = vadd.f32 %v616, %v1302
      %v1304 = vpop.f32.mrb[0].mxu0
      %v1305 = vadd.f32 %v620, %v1304
      %v1306 = vpop.f32.mrb[0].mxu0
      %v1307 = vadd.f32 %v616, %v1306
      %v1308 = vpop.f32.mrb[0].mxu0
      %v1309 = vadd.f32 %v620, %v1308
      %1310 = vmatprep.mubr.bf16.mxu0 %v1215
      %1311 = vmatmul.mubr.bf16.gmra.mrb[0].mxu0 %v1214
      %v1312 = vpop.f32.mrb[0].mxu0
      %v1313 = vadd.f32 %v616, %v1312
      %v1314 = vpop.f32.mrb[0].mxu0
      %v1315 = vadd.f32 %v620, %v1314
      %v1316 = vpop.f32.mrb[0].mxu0
      %v1317 = vadd.f32 %v616, %v1316
      %v1318 = vpop.f32.mrb[0].mxu0
      %v1319 = vadd.f32 %v620, %v1318
      %1320 = vmatprep.mubr.bf16.mxu0 %v1217
      %1321 = vmatmul.mubr.bf16.gmra.mrb[0].mxu0 %v1216
      %v1322 = vpop.f32.mrb[0].mxu0
      %v1323 = vadd.f32 %v616, %v1322
      %v1324 = vpop.f32.mrb[0].mxu0
      %v1325 = vadd.f32 %v620, %v1324
      %v1326 = vpop.f32.mrb[0].mxu0
      %v1327 = vadd.f32 %v616, %v1326
      %v1328 = vpop.f32.mrb[0].mxu0
      %v1329 = vadd.f32 %v620, %v1328
      %1330 = vdwg.mxu0
      %v1331 = vpack.c.bf16 %v1257, %v1253
      %v1332 = vpack.c.bf16 %v1259, %v1255
      %v1333 = vpack.c.bf16 %v1267, %v1263
      %v1334 = vpack.c.bf16 %v1269, %v1265
      %v1335 = vpack.c.bf16 %v1277, %v1273
      %v1336 = vpack.c.bf16 %v1279, %v1275
      %v1337 = vpack.c.bf16 %v1287, %v1283
      %v1338 = vpack.c.bf16 %v1289, %v1285
      %v1339 = vpack.c.bf16 %v1297, %v1293
      %v1340 = vpack.c.bf16 %v1299, %v1295
      %v1341 = vpack.c.bf16 %v1307, %v1303
      %v1342 = vpack.c.bf16 %v1309, %v1305
      %v1343 = vpack.c.bf16 %v1317, %v1313
      %v1344 = vpack.c.bf16 %v1319, %v1315
      %v1345 = vpack.c.bf16 %v1327, %v1323
      %v1346 = vpack.c.bf16 %v1329, %v1325
      %v1347 = vtanh.bf16.pop %v1331
      %v1348 = vtanh.bf16.pop %v1332
      %v1349 = vtanh.bf16.pop %v1333
      %v1350 = vtanh.bf16.pop %v1334
      %v1351 = vtanh.bf16.pop %v1335
      %v1352 = vtanh.bf16.pop %v1336
      %v1353 = vtanh.bf16.pop %v1337
      %v1354 = vtanh.bf16.pop %v1338
      %v1355 = vtanh.bf16.pop %v1339
      %v1356 = vtanh.bf16.pop %v1340
      %v1357 = vtanh.bf16.pop %v1341
      %v1358 = vtanh.bf16.pop %v1342
      %v1359 = vtanh.bf16.pop %v1343
      %v1360 = vtanh.bf16.pop %v1344
      %v1361 = vtanh.bf16.pop %v1345
      %v1362 = vtanh.bf16.pop %v1346
      %1363 = vmatprep.subr.bf16.mxu0 %v720
      %1364 = vmatpush1.bf16.msra.mxu0 %v719
      %1365 = vmatprep.subr.bf16.mxu0 %v722
      %1366 = vmatpush1.bf16.msra.mxu0 %v721
      %1367 = vmatprep.subr.bf16.mxu0 %v724
      %1368 = vmatpush1.bf16.msra.mxu0 %v723
      %1369 = vmatprep.subr.bf16.mxu0 %v726
      %1370 = vmatpush1.bf16.msra.mxu0 %v725
      %1371 = vmatprep.subr.bf16.mxu0 %v728
      %1372 = vmatpush1.bf16.msra.mxu0 %v727
      %1373 = vmatprep.subr.bf16.mxu0 %v730
      %1374 = vmatpush1.bf16.msra.mxu0 %v729
      %1375 = vmatprep.subr.bf16.mxu0 %v732
      %1376 = vmatpush1.bf16.msra.mxu0 %v731
      %1377 = vmatprep.subr.bf16.mxu0 %v734
      %1378 = vmatpush1.bf16.msra.mxu0 %v733
      %1379 = vmatprep.subr.bf16.mxu0 %v736
      %1380 = vmatpush1.bf16.msra.mxu0 %v735
      %1381 = vmatprep.subr.bf16.mxu0 %v738
      %1382 = vmatpush1.bf16.msra.mxu0 %v737
      %1383 = vmatprep.subr.bf16.mxu0 %v740
      %1384 = vmatpush1.bf16.msra.mxu0 %v739
      %1385 = vmatprep.subr.bf16.mxu0 %v742
      %1386 = vmatpush1.bf16.msra.mxu0 %v741
      %1387 = vmatprep.subr.bf16.mxu0 %v744
      %1388 = vmatpush1.bf16.msra.mxu0 %v743
      %1389 = vmatprep.subr.bf16.mxu0 %v746
      %1390 = vmatpush1.bf16.msra.mxu0 %v745
      %1391 = vmatprep.subr.bf16.mxu0 %v748
      %1392 = vmatpush1.bf16.msra.mxu0 %v747
      %1393 = vmatprep.subr.bf16.mxu0 %v750
      %1394 = vmatpush1.bf16.msra.mxu0 %v749
      %1395 = vmatprep.mubr.bf16.mxu0 %v1348
      %1396 = vmatmul.mubr.bf16.gmra.mrb[0].mxu0 %v1347
      %v1397 = vpop.f32.mrb[0].mxu0
      %v1398 = vadd.f32 %v616, %v1397
      %v1399 = vpop.f32.mrb[0].mxu0
      %v1400 = vadd.f32 %v620, %v1399
      %v1401 = vpop.f32.mrb[0].mxu0
      %v1402 = vadd.f32 %v616, %v1401
      %v1403 = vpop.f32.mrb[0].mxu0
      %v1404 = vadd.f32 %v620, %v1403
      %1405 = vmatprep.mubr.bf16.mxu0 %v1350
      %1406 = vmatmul.mubr.bf16.gmra.mrb[0].mxu0 %v1349
      %v1407 = vpop.f32.mrb[0].mxu0
      %v1408 = vadd.f32 %v616, %v1407
      %v1409 = vpop.f32.mrb[0].mxu0
      %v1410 = vadd.f32 %v620, %v1409
      %v1411 = vpop.f32.mrb[0].mxu0
      %v1412 = vadd.f32 %v616, %v1411
      %v1413 = vpop.f32.mrb[0].mxu0
      %v1414 = vadd.f32 %v620, %v1413
      %1415 = vmatprep.mubr.bf16.mxu0 %v1352
      %1416 = vmatmul.mubr.bf16.gmra.mrb[0].mxu0 %v1351
      %v1417 = vpop.f32.mrb[0].mxu0
      %v1418 = vadd.f32 %v616, %v1417
      %v1419 = vpop.f32.mrb[0].mxu0
      %v1420 = vadd.f32 %v620, %v1419
      %v1421 = vpop.f32.mrb[0].mxu0
      %v1422 = vadd.f32 %v616, %v1421
      %v1423 = vpop.f32.mrb[0].mxu0
      %v1424 = vadd.f32 %v620, %v1423
      %1425 = vmatprep.mubr.bf16.mxu0 %v1354
      %1426 = vmatmul.mubr.bf16.gmra.mrb[0].mxu0 %v1353
      %v1427 = vpop.f32.mrb[0].mxu0
      %v1428 = vadd.f32 %v616, %v1427
      %v1429 = vpop.f32.mrb[0].mxu0
      %v1430 = vadd.f32 %v620, %v1429
      %v1431 = vpop.f32.mrb[0].mxu0
      %v1432 = vadd.f32 %v616, %v1431
      %v1433 = vpop.f32.mrb[0].mxu0
      %v1434 = vadd.f32 %v620, %v1433
      %1435 = vmatprep.mubr.bf16.mxu0 %v1356
      %1436 = vmatmul.mubr.bf16.gmra.mrb[0].mxu0 %v1355
      %v1437 = vpop.f32.mrb[0].mxu0
      %v1438 = vadd.f32 %v616, %v1437
      %v1439 = vpop.f32.mrb[0].mxu0
      %v1440 = vadd.f32 %v620, %v1439
      %v1441 = vpop.f32.mrb[0].mxu0
      %v1442 = vadd.f32 %v616, %v1441
      %v1443 = vpop.f32.mrb[0].mxu0
      %v1444 = vadd.f32 %v620, %v1443
      %1445 = vmatprep.mubr.bf16.mxu0 %v1358
      %1446 = vmatmul.mubr.bf16.gmra.mrb[0].mxu0 %v1357
      %v1447 = vpop.f32.mrb[0].mxu0
      %v1448 = vadd.f32 %v616, %v1447
      %v1449 = vpop.f32.mrb[0].mxu0
      %v1450 = vadd.f32 %v620, %v1449
      %v1451 = vpop.f32.mrb[0].mxu0
      %v1452 = vadd.f32 %v616, %v1451
      %v1453 = vpop.f32.mrb[0].mxu0
      %v1454 = vadd.f32 %v620, %v1453
      %1455 = vmatprep.mubr.bf16.mxu0 %v1360
      %1456 = vmatmul.mubr.bf16.gmra.mrb[0].mxu0 %v1359
      %v1457 = vpop.f32.mrb[0].mxu0
      %v1458 = vadd.f32 %v616, %v1457
      %v1459 = vpop.f32.mrb[0].mxu0
      %v1460 = vadd.f32 %v620, %v1459
      %v1461 = vpop.f32.mrb[0].mxu0
      %v1462 = vadd.f32 %v616, %v1461
      %v1463 = vpop.f32.mrb[0].mxu0
      %v1464 = vadd.f32 %v620, %v1463
      %1465 = vmatprep.mubr.bf16.mxu0 %v1362
      %1466 = vmatmul.mubr.bf16.gmra.mrb[0].mxu0 %v1361
      %v1467 = vpop.f32.mrb[0].mxu0
      %v1468 = vadd.f32 %v616, %v1467
      %v1469 = vpop.f32.mrb[0].mxu0
      %v1470 = vadd.f32 %v620, %v1469
      %v1471 = vpop.f32.mrb[0].mxu0
      %v1472 = vadd.f32 %v616, %v1471
      %v1473 = vpop.f32.mrb[0].mxu0
      %v1474 = vadd.f32 %v620, %v1473
      %1475 = vdwg.mxu0
      %v1476 = vpack.c.bf16 %v1402, %v1398
      %v1477 = vpack.c.bf16 %v1404, %v1400
      %v1478 = vpack.c.bf16 %v1412, %v1408
      %v1479 = vpack.c.bf16 %v1414, %v1410
      %v1480 = vpack.c.bf16 %v1422, %v1418
      %v1481 = vpack.c.bf16 %v1424, %v1420
      %v1482 = vpack.c.bf16 %v1432, %v1428
      %v1483 = vpack.c.bf16 %v1434, %v1430
      %v1484 = vpack.c.bf16 %v1442, %v1438
      %v1485 = vpack.c.bf16 %v1444, %v1440
      %v1486 = vpack.c.bf16 %v1452, %v1448
      %v1487 = vpack.c.bf16 %v1454, %v1450
      %v1488 = vpack.c.bf16 %v1462, %v1458
      %v1489 = vpack.c.bf16 %v1464, %v1460
      %v1490 = vpack.c.bf16 %v1472, %v1468
      %v1491 = vpack.c.bf16 %v1474, %v1470
      %v1492 = vtanh.bf16.pop %v1476
      %v1493 = vtanh.bf16.pop %v1477
      %v1494 = vtanh.bf16.pop %v1478
      %v1495 = vtanh.bf16.pop %v1479
      %v1496 = vtanh.bf16.pop %v1480
      %v1497 = vtanh.bf16.pop %v1481
      %v1498 = vtanh.bf16.pop %v1482
      %v1499 = vtanh.bf16.pop %v1483
      %v1500 = vtanh.bf16.pop %v1484
      %v1501 = vtanh.bf16.pop %v1485
      %v1502 = vtanh.bf16.pop %v1486
      %v1503 = vtanh.bf16.pop %v1487
      %v1504 = vtanh.bf16.pop %v1488
      %v1505 = vtanh.bf16.pop %v1489
      %v1506 = vtanh.bf16.pop %v1490
      %v1507 = vtanh.bf16.pop %v1491
      %1508 = vmatprep.subr.bf16.mxu0 %v720
      %1509 = vmatpush1.bf16.msra.mxu0 %v719
      %1510 = vmatprep.subr.bf16.mxu0 %v722
      %1511 = vmatpush1.bf16.msra.mxu0 %v721
      %1512 = vmatprep.subr.bf16.mxu0 %v724
      %1513 = vmatpush1.bf16.msra.mxu0 %v723
      %1514 = vmatprep.subr.bf16.mxu0 %v726
      %1515 = vmatpush1.bf16.msra.mxu0 %v725
      %1516 = vmatprep.subr.bf16.mxu0 %v728
      %1517 = vmatpush1.bf16.msra.mxu0 %v727
      %1518 = vmatprep.subr.bf16.mxu0 %v730
      %1519 = vmatpush1.bf16.msra.mxu0 %v729
      %1520 = vmatprep.subr.bf16.mxu0 %v732
      %1521 = vmatpush1.bf16.msra.mxu0 %v731
      %1522 = vmatprep.subr.bf16.mxu0 %v734
      %1523 = vmatpush1.bf16.msra.mxu0 %v733
      %1524 = vmatprep.subr.bf16.mxu0 %v736
      %1525 = vmatpush1.bf16.msra.mxu0 %v735
      %1526 = vmatprep.subr.bf16.mxu0 %v738
      %1527 = vmatpush1.bf16.msra.mxu0 %v737
      %1528 = vmatprep.subr.bf16.mxu0 %v740
      %1529 = vmatpush1.bf16.msra.mxu0 %v739
      %1530 = vmatprep.subr.bf16.mxu0 %v742
      %1531 = vmatpush1.bf16.msra.mxu0 %v741
      %1532 = vmatprep.subr.bf16.mxu0 %v744
      %1533 = vmatpush1.bf16.msra.mxu0 %v743
      %1534 = vmatprep.subr.bf16.mxu0 %v746
      %1535 = vmatpush1.bf16.msra.mxu0 %v745
      %1536 = vmatprep.subr.bf16.mxu0 %v748
      %1537 = vmatpush1.bf16.msra.mxu0 %v747
      %1538 = vmatprep.subr.bf16.mxu0 %v750
      %1539 = vmatpush1.bf16.msra.mxu0 %v749
      %1540 = vmatprep.mubr.bf16.mxu0 %v1493
      %1541 = vmatmul.mubr.bf16.gmra.mrb[0].mxu0 %v1492
      %v1542 = vpop.f32.mrb[0].mxu0
      %v1543 = vadd.f32 %v616, %v1542
      %v1544 = vpop.f32.mrb[0].mxu0
      %v1545 = vadd.f32 %v620, %v1544
      %v1546 = vpop.f32.mrb[0].mxu0
      %v1547 = vadd.f32 %v616, %v1546
      %v1548 = vpop.f32.mrb[0].mxu0
      %v1549 = vadd.f32 %v620, %v1548
      %1550 = vmatprep.mubr.bf16.mxu0 %v1495
      %1551 = vmatmul.mubr.bf16.gmra.mrb[0].mxu0 %v1494
      %v1552 = vpop.f32.mrb[0].mxu0
      %v1553 = vadd.f32 %v616, %v1552
      %v1554 = vpop.f32.mrb[0].mxu0
      %v1555 = vadd.f32 %v620, %v1554
      %v1556 = vpop.f32.mrb[0].mxu0
      %v1557 = vadd.f32 %v616, %v1556
      %v1558 = vpop.f32.mrb[0].mxu0
      %v1559 = vadd.f32 %v620, %v1558
      %1560 = vmatprep.mubr.bf16.mxu0 %v1497
      %1561 = vmatmul.mubr.bf16.gmra.mrb[0].mxu0 %v1496
      %v1562 = vpop.f32.mrb[0].mxu0
      %v1563 = vadd.f32 %v616, %v1562
      %v1564 = vpop.f32.mrb[0].mxu0
      %v1565 = vadd.f32 %v620, %v1564
      %v1566 = vpop.f32.mrb[0].mxu0
      %v1567 = vadd.f32 %v616, %v1566
      %v1568 = vpop.f32.mrb[0].mxu0
      %v1569 = vadd.f32 %v620, %v1568
      %1570 = vmatprep.mubr.bf16.mxu0 %v1499
      %1571 = vmatmul.mubr.bf16.gmra.mrb[0].mxu0 %v1498
      %v1572 = vpop.f32.mrb[0].mxu0
      %v1573 = vadd.f32 %v616, %v1572
      %v1574 = vpop.f32.mrb[0].mxu0
      %v1575 = vadd.f32 %v620, %v1574
      %v1576 = vpop.f32.mrb[0].mxu0
      %v1577 = vadd.f32 %v616, %v1576
      %v1578 = vpop.f32.mrb[0].mxu0
      %v1579 = vadd.f32 %v620, %v1578
      %1580 = vmatprep.mubr.bf16.mxu0 %v1501
      %1581 = vmatmul.mubr.bf16.gmra.mrb[0].mxu0 %v1500
      %v1582 = vpop.f32.mrb[0].mxu0
      %v1583 = vadd.f32 %v616, %v1582
      %v1584 = vpop.f32.mrb[0].mxu0
      %v1585 = vadd.f32 %v620, %v1584
      %v1586 = vpop.f32.mrb[0].mxu0
      %v1587 = vadd.f32 %v616, %v1586
      %v1588 = vpop.f32.mrb[0].mxu0
      %v1589 = vadd.f32 %v620, %v1588
      %1590 = vmatprep.mubr.bf16.mxu0 %v1503
      %1591 = vmatmul.mubr.bf16.gmra.mrb[0].mxu0 %v1502
      %v1592 = vpop.f32.mrb[0].mxu0
      %v1593 = vadd.f32 %v616, %v1592
      %v1594 = vpop.f32.mrb[0].mxu0
      %v1595 = vadd.f32 %v620, %v1594
      %v1596 = vpop.f32.mrb[0].mxu0
      %v1597 = vadd.f32 %v616, %v1596
      %v1598 = vpop.f32.mrb[0].mxu0
      %v1599 = vadd.f32 %v620, %v1598
      %1600 = vmatprep.mubr.bf16.mxu0 %v1505
      %1601 = vmatmul.mubr.bf16.gmra.mrb[0].mxu0 %v1504
      %v1602 = vpop.f32.mrb[0].mxu0
      %v1603 = vadd.f32 %v616, %v1602
      %v1604 = vpop.f32.mrb[0].mxu0
      %v1605 = vadd.f32 %v620, %v1604
      %v1606 = vpop.f32.mrb[0].mxu0
      %v1607 = vadd.f32 %v616, %v1606
      %v1608 = vpop.f32.mrb[0].mxu0
      %v1609 = vadd.f32 %v620, %v1608
      %1610 = vmatprep.mubr.bf16.mxu0 %v1507
      %1611 = vmatmul.mubr.bf16.gmra.mrb[0].mxu0 %v1506
      %v1612 = vpop.f32.mrb[0].mxu0
      %v1613 = vadd.f32 %v616, %v1612
      %v1614 = vpop.f32.mrb[0].mxu0
      %v1615 = vadd.f32 %v620, %v1614
      %v1616 = vpop.f32.mrb[0].mxu0
      %v1617 = vadd.f32 %v616, %v1616
      %v1618 = vpop.f32.mrb[0].mxu0
      %v1619 = vadd.f32 %v620, %v1618
      %1620 = vdwg.mxu0
      %v1621 = vpack.c.bf16 %v1547, %v1543
      %v1622 = vpack.c.bf16 %v1549, %v1545
      %v1623 = vpack.c.bf16 %v1557, %v1553
      %v1624 = vpack.c.bf16 %v1559, %v1555
      %v1625 = vpack.c.bf16 %v1567, %v1563
      %v1626 = vpack.c.bf16 %v1569, %v1565
      %v1627 = vpack.c.bf16 %v1577, %v1573
      %v1628 = vpack.c.bf16 %v1579, %v1575
      %v1629 = vpack.c.bf16 %v1587, %v1583
      %v1630 = vpack.c.bf16 %v1589, %v1585
      %v1631 = vpack.c.bf16 %v1597, %v1593
      %v1632 = vpack.c.bf16 %v1599, %v1595
      %v1633 = vpack.c.bf16 %v1607, %v1603
      %v1634 = vpack.c.bf16 %v1609, %v1605
      %v1635 = vpack.c.bf16 %v1617, %v1613
      %v1636 = vpack.c.bf16 %v1619, %v1615
      %v1637 = vtanh.bf16.pop %v1621
      %v1638 = vtanh.bf16.pop %v1622
      %v1639 = vtanh.bf16.pop %v1623
      %v1640 = vtanh.bf16.pop %v1624
      %v1641 = vtanh.bf16.pop %v1625
      %v1642 = vtanh.bf16.pop %v1626
      %v1643 = vtanh.bf16.pop %v1627
      %v1644 = vtanh.bf16.pop %v1628
      %v1645 = vtanh.bf16.pop %v1629
      %v1646 = vtanh.bf16.pop %v1630
      %v1647 = vtanh.bf16.pop %v1631
      %v1648 = vtanh.bf16.pop %v1632
      %v1649 = vtanh.bf16.pop %v1633
      %v1650 = vtanh.bf16.pop %v1634
      %v1651 = vtanh.bf16.pop %v1635
      %v1652 = vtanh.bf16.pop %v1636
      %1653 = vmatprep.subr.bf16.mxu0 %v720
      %1654 = vmatpush1.bf16.msra.mxu0 %v719
      %1655 = vmatprep.subr.bf16.mxu0 %v722
      %1656 = vmatpush1.bf16.msra.mxu0 %v721
      %1657 = vmatprep.subr.bf16.mxu0 %v724
      %1658 = vmatpush1.bf16.msra.mxu0 %v723
      %1659 = vmatprep.subr.bf16.mxu0 %v726
      %1660 = vmatpush1.bf16.msra.mxu0 %v725
      %1661 = vmatprep.subr.bf16.mxu0 %v728
      %1662 = vmatpush1.bf16.msra.mxu0 %v727
      %1663 = vmatprep.subr.bf16.mxu0 %v730
      %1664 = vmatpush1.bf16.msra.mxu0 %v729
      %1665 = vmatprep.subr.bf16.mxu0 %v732
      %1666 = vmatpush1.bf16.msra.mxu0 %v731
      %1667 = vmatprep.subr.bf16.mxu0 %v734
      %1668 = vmatpush1.bf16.msra.mxu0 %v733
      %1669 = vmatprep.subr.bf16.mxu0 %v736
      %1670 = vmatpush1.bf16.msra.mxu0 %v735
      %1671 = vmatprep.subr.bf16.mxu0 %v738
      %1672 = vmatpush1.bf16.msra.mxu0 %v737
      %1673 = vmatprep.subr.bf16.mxu0 %v740
      %1674 = vmatpush1.bf16.msra.mxu0 %v739
      %1675 = vmatprep.subr.bf16.mxu0 %v742
      %1676 = vmatpush1.bf16.msra.mxu0 %v741
      %1677 = vmatprep.subr.bf16.mxu0 %v744
      %1678 = vmatpush1.bf16.msra.mxu0 %v743
      %1679 = vmatprep.subr.bf16.mxu0 %v746
      %1680 = vmatpush1.bf16.msra.mxu0 %v745
      %1681 = vmatprep.subr.bf16.mxu0 %v748
      %1682 = vmatpush1.bf16.msra.mxu0 %v747
      %1683 = vmatprep.subr.bf16.mxu0 %v750
      %1684 = vmatpush1.bf16.msra.mxu0 %v749
      %1685 = vmatprep.mubr.bf16.mxu0 %v1638
      %1686 = vmatmul.mubr.bf16.gmra.mrb[0].mxu0 %v1637
      %v1687 = vpop.f32.mrb[0].mxu0
      %v1688 = vadd.f32 %v616, %v1687
      %v1689 = vpop.f32.mrb[0].mxu0
      %v1690 = vadd.f32 %v620, %v1689
      %v1691 = vpop.f32.mrb[0].mxu0
      %v1692 = vadd.f32 %v616, %v1691
      %v1693 = vpop.f32.mrb[0].mxu0
      %v1694 = vadd.f32 %v620, %v1693
      %1695 = vmatprep.mubr.bf16.mxu0 %v1640
      %1696 = vmatmul.mubr.bf16.gmra.mrb[0].mxu0 %v1639
      %v1697 = vpop.f32.mrb[0].mxu0
      %v1698 = vadd.f32 %v616, %v1697
      %v1699 = vpop.f32.mrb[0].mxu0
      %v1700 = vadd.f32 %v620, %v1699
      %v1701 = vpop.f32.mrb[0].mxu0
      %v1702 = vadd.f32 %v616, %v1701
      %v1703 = vpop.f32.mrb[0].mxu0
      %v1704 = vadd.f32 %v620, %v1703
      %1705 = vmatprep.mubr.bf16.mxu0 %v1642
      %1706 = vmatmul.mubr.bf16.gmra.mrb[0].mxu0 %v1641
      %v1707 = vpop.f32.mrb[0].mxu0
      %v1708 = vadd.f32 %v616, %v1707
      %v1709 = vpop.f32.mrb[0].mxu0
      %v1710 = vadd.f32 %v620, %v1709
      %v1711 = vpop.f32.mrb[0].mxu0
      %v1712 = vadd.f32 %v616, %v1711
      %v1713 = vpop.f32.mrb[0].mxu0
      %v1714 = vadd.f32 %v620, %v1713
      %1715 = vmatprep.mubr.bf16.mxu0 %v1644
      %1716 = vmatmul.mubr.bf16.gmra.mrb[0].mxu0 %v1643
      %v1717 = vpop.f32.mrb[0].mxu0
      %v1718 = vadd.f32 %v616, %v1717
      %v1719 = vpop.f32.mrb[0].mxu0
      %v1720 = vadd.f32 %v620, %v1719
      %v1721 = vpop.f32.mrb[0].mxu0
      %v1722 = vadd.f32 %v616, %v1721
      %v1723 = vpop.f32.mrb[0].mxu0
      %v1724 = vadd.f32 %v620, %v1723
      %1725 = vmatprep.mubr.bf16.mxu0 %v1646
      %1726 = vmatmul.mubr.bf16.gmra.mrb[0].mxu0 %v1645
      %v1727 = vpop.f32.mrb[0].mxu0
      %v1728 = vadd.f32 %v616, %v1727
      %v1729 = vpop.f32.mrb[0].mxu0
      %v1730 = vadd.f32 %v620, %v1729
      %v1731 = vpop.f32.mrb[0].mxu0
      %v1732 = vadd.f32 %v616, %v1731
      %v1733 = vpop.f32.mrb[0].mxu0
      %v1734 = vadd.f32 %v620, %v1733
      %1735 = vmatprep.mubr.bf16.mxu0 %v1648
      %1736 = vmatmul.mubr.bf16.gmra.mrb[0].mxu0 %v1647
      %v1737 = vpop.f32.mrb[0].mxu0
      %v1738 = vadd.f32 %v616, %v1737
      %v1739 = vpop.f32.mrb[0].mxu0
      %v1740 = vadd.f32 %v620, %v1739
      %v1741 = vpop.f32.mrb[0].mxu0
      %v1742 = vadd.f32 %v616, %v1741
      %v1743 = vpop.f32.mrb[0].mxu0
      %v1744 = vadd.f32 %v620, %v1743
      %1745 = vmatprep.mubr.bf16.mxu0 %v1650
      %1746 = vmatmul.mubr.bf16.gmra.mrb[0].mxu0 %v1649
      %v1747 = vpop.f32.mrb[0].mxu0
      %v1748 = vadd.f32 %v616, %v1747
      %v1749 = vpop.f32.mrb[0].mxu0
      %v1750 = vadd.f32 %v620, %v1749
      %v1751 = vpop.f32.mrb[0].mxu0
      %v1752 = vadd.f32 %v616, %v1751
      %v1753 = vpop.f32.mrb[0].mxu0
      %v1754 = vadd.f32 %v620, %v1753
      %1755 = vmatprep.mubr.bf16.mxu0 %v1652
      %1756 = vmatmul.mubr.bf16.gmra.mrb[0].mxu0 %v1651
      %v1757 = vpop.f32.mrb[0].mxu0
      %v1758 = vadd.f32 %v616, %v1757
      %v1759 = vpop.f32.mrb[0].mxu0
      %v1760 = vadd.f32 %v620, %v1759
      %v1761 = vpop.f32.mrb[0].mxu0
      %v1762 = vadd.f32 %v616, %v1761
      %v1763 = vpop.f32.mrb[0].mxu0
      %v1764 = vadd.f32 %v620, %v1763
      %1765 = vdwg.mxu0
      %v1766 = vpack.c.bf16 %v1692, %v1688
      %v1767 = vpack.c.bf16 %v1694, %v1690
      %v1768 = vpack.c.bf16 %v1702, %v1698
      %v1769 = vpack.c.bf16 %v1704, %v1700
      %v1770 = vpack.c.bf16 %v1712, %v1708
      %v1771 = vpack.c.bf16 %v1714, %v1710
      %v1772 = vpack.c.bf16 %v1722, %v1718
      %v1773 = vpack.c.bf16 %v1724, %v1720
      %v1774 = vpack.c.bf16 %v1732, %v1728
      %v1775 = vpack.c.bf16 %v1734, %v1730
      %v1776 = vpack.c.bf16 %v1742, %v1738
      %v1777 = vpack.c.bf16 %v1744, %v1740
      %v1778 = vpack.c.bf16 %v1752, %v1748
      %v1779 = vpack.c.bf16 %v1754, %v1750
      %v1780 = vpack.c.bf16 %v1762, %v1758
      %v1781 = vpack.c.bf16 %v1764, %v1760
      %v1782 = vtanh.bf16.pop %v1766
      %v1783 = vtanh.bf16.pop %v1767
      %v1784 = vtanh.bf16.pop %v1768
      %v1785 = vtanh.bf16.pop %v1769
      %v1786 = vtanh.bf16.pop %v1770
      %v1787 = vtanh.bf16.pop %v1771
      %v1788 = vtanh.bf16.pop %v1772
      %v1789 = vtanh.bf16.pop %v1773
      %v1790 = vtanh.bf16.pop %v1774
      %v1791 = vtanh.bf16.pop %v1775
      %v1792 = vtanh.bf16.pop %v1776
      %v1793 = vtanh.bf16.pop %v1777
      %v1794 = vtanh.bf16.pop %v1778
      %v1795 = vtanh.bf16.pop %v1779
      %v1796 = vtanh.bf16.pop %v1780
      %v1797 = vtanh.bf16.pop %v1781
      %1798 = vmatprep.subr.bf16.mxu0 %v720
      %1799 = vmatpush1.bf16.msra.mxu0 %v719
      %1800 = vmatprep.subr.bf16.mxu0 %v722
      %1801 = vmatpush1.bf16.msra.mxu0 %v721
      %1802 = vmatprep.subr.bf16.mxu0 %v724
      %1803 = vmatpush1.bf16.msra.mxu0 %v723
      %1804 = vmatprep.subr.bf16.mxu0 %v726
      %1805 = vmatpush1.bf16.msra.mxu0 %v725
      %1806 = vmatprep.subr.bf16.mxu0 %v728
      %1807 = vmatpush1.bf16.msra.mxu0 %v727
      %1808 = vmatprep.subr.bf16.mxu0 %v730
      %1809 = vmatpush1.bf16.msra.mxu0 %v729
      %1810 = vmatprep.subr.bf16.mxu0 %v732
      %1811 = vmatpush1.bf16.msra.mxu0 %v731
      %1812 = vmatprep.subr.bf16.mxu0 %v734
      %1813 = vmatpush1.bf16.msra.mxu0 %v733
      %1814 = vmatprep.subr.bf16.mxu0 %v736
      %1815 = vmatpush1.bf16.msra.mxu0 %v735
      %1816 = vmatprep.subr.bf16.mxu0 %v738
      %1817 = vmatpush1.bf16.msra.mxu0 %v737
      %1818 = vmatprep.subr.bf16.mxu0 %v740
      %1819 = vmatpush1.bf16.msra.mxu0 %v739
      %1820 = vmatprep.subr.bf16.mxu0 %v742
      %1821 = vmatpush1.bf16.msra.mxu0 %v741
      %1822 = vmatprep.subr.bf16.mxu0 %v744
      %1823 = vmatpush1.bf16.msra.mxu0 %v743
      %1824 = vmatprep.subr.bf16.mxu0 %v746
      %1825 = vmatpush1.bf16.msra.mxu0 %v745
      %1826 = vmatprep.subr.bf16.mxu0 %v748
      %1827 = vmatpush1.bf16.msra.mxu0 %v747
      %1828 = vmatprep.subr.bf16.mxu0 %v750
      %1829 = vmatpush1.bf16.msra.mxu0 %v749
      %1830 = vmatprep.mubr.bf16.mxu0 %v1783
      %1831 = vmatmul.mubr.bf16.gmra.mrb[0].mxu0 %v1782
      %v1832 = vpop.f32.mrb[0].mxu0
      %v1833 = vadd.f32 %v616, %v1832
      %v1834 = vpop.f32.mrb[0].mxu0
      %v1835 = vadd.f32 %v620, %v1834
      %v1836 = vpop.f32.mrb[0].mxu0
      %v1837 = vadd.f32 %v616, %v1836
      %v1838 = vpop.f32.mrb[0].mxu0
      %v1839 = vadd.f32 %v620, %v1838
      %1840 = vmatprep.mubr.bf16.mxu0 %v1785
      %1841 = vmatmul.mubr.bf16.gmra.mrb[0].mxu0 %v1784
      %v1842 = vpop.f32.mrb[0].mxu0
      %v1843 = vadd.f32 %v616, %v1842
      %v1844 = vpop.f32.mrb[0].mxu0
      %v1845 = vadd.f32 %v620, %v1844
      %v1846 = vpop.f32.mrb[0].mxu0
      %v1847 = vadd.f32 %v616, %v1846
      %v1848 = vpop.f32.mrb[0].mxu0
      %v1849 = vadd.f32 %v620, %v1848
      %1850 = vmatprep.mubr.bf16.mxu0 %v1787
      %1851 = vmatmul.mubr.bf16.gmra.mrb[0].mxu0 %v1786
      %v1852 = vpop.f32.mrb[0].mxu0
      %v1853 = vadd.f32 %v616, %v1852
      %v1854 = vpop.f32.mrb[0].mxu0
      %v1855 = vadd.f32 %v620, %v1854
      %v1856 = vpop.f32.mrb[0].mxu0
      %v1857 = vadd.f32 %v616, %v1856
      %v1858 = vpop.f32.mrb[0].mxu0
      %v1859 = vadd.f32 %v620, %v1858
      %1860 = vmatprep.mubr.bf16.mxu0 %v1789
      %1861 = vmatmul.mubr.bf16.gmra.mrb[0].mxu0 %v1788
      %v1862 = vpop.f32.mrb[0].mxu0
      %v1863 = vadd.f32 %v616, %v1862
      %v1864 = vpop.f32.mrb[0].mxu0
      %v1865 = vadd.f32 %v620, %v1864
      %v1866 = vpop.f32.mrb[0].mxu0
      %v1867 = vadd.f32 %v616, %v1866
      %v1868 = vpop.f32.mrb[0].mxu0
      %v1869 = vadd.f32 %v620, %v1868
      %1870 = vmatprep.mubr.bf16.mxu0 %v1791
      %1871 = vmatmul.mubr.bf16.gmra.mrb[0].mxu0 %v1790
      %v1872 = vpop.f32.mrb[0].mxu0
      %v1873 = vadd.f32 %v616, %v1872
      %v1874 = vpop.f32.mrb[0].mxu0
      %v1875 = vadd.f32 %v620, %v1874
      %v1876 = vpop.f32.mrb[0].mxu0
      %v1877 = vadd.f32 %v616, %v1876
      %v1878 = vpop.f32.mrb[0].mxu0
      %v1879 = vadd.f32 %v620, %v1878
      %1880 = vmatprep.mubr.bf16.mxu0 %v1793
      %1881 = vmatmul.mubr.bf16.gmra.mrb[0].mxu0 %v1792
      %v1882 = vpop.f32.mrb[0].mxu0
      %v1883 = vadd.f32 %v616, %v1882
      %v1884 = vpop.f32.mrb[0].mxu0
      %v1885 = vadd.f32 %v620, %v1884
      %v1886 = vpop.f32.mrb[0].mxu0
      %v1887 = vadd.f32 %v616, %v1886
      %v1888 = vpop.f32.mrb[0].mxu0
      %v1889 = vadd.f32 %v620, %v1888
      %1890 = vmatprep.mubr.bf16.mxu0 %v1795
      %1891 = vmatmul.mubr.bf16.gmra.mrb[0].mxu0 %v1794
      %v1892 = vpop.f32.mrb[0].mxu0
      %v1893 = vadd.f32 %v616, %v1892
      %v1894 = vpop.f32.mrb[0].mxu0
      %v1895 = vadd.f32 %v620, %v1894
      %v1896 = vpop.f32.mrb[0].mxu0
      %v1897 = vadd.f32 %v616, %v1896
      %v1898 = vpop.f32.mrb[0].mxu0
      %v1899 = vadd.f32 %v620, %v1898
      %1900 = vmatprep.mubr.bf16.mxu0 %v1797
      %1901 = vmatmul.mubr.bf16.gmra.mrb[0].mxu0 %v1796
      %v1902 = vpop.f32.mrb[0].mxu0
      %v1903 = vadd.f32 %v616, %v1902
      %v1904 = vpop.f32.mrb[0].mxu0
      %v1905 = vadd.f32 %v620, %v1904
      %v1906 = vpop.f32.mrb[0].mxu0
      %v1907 = vadd.f32 %v616, %v1906
      %v1908 = vpop.f32.mrb[0].mxu0
      %v1909 = vadd.f32 %v620, %v1908
      %1910 = vdwg.mxu0
      %v1911 = vpack.c.bf16 %v1837, %v1833
      %v1912 = vpack.c.bf16 %v1839, %v1835
      %v1913 = vpack.c.bf16 %v1847, %v1843
      %v1914 = vpack.c.bf16 %v1849, %v1845
      %v1915 = vpack.c.bf16 %v1857, %v1853
      %v1916 = vpack.c.bf16 %v1859, %v1855
      %v1917 = vpack.c.bf16 %v1867, %v1863
      %v1918 = vpack.c.bf16 %v1869, %v1865
      %v1919 = vpack.c.bf16 %v1877, %v1873
      %v1920 = vpack.c.bf16 %v1879, %v1875
      %v1921 = vpack.c.bf16 %v1887, %v1883
      %v1922 = vpack.c.bf16 %v1889, %v1885
      %v1923 = vpack.c.bf16 %v1897, %v1893
      %v1924 = vpack.c.bf16 %v1899, %v1895
      %v1925 = vpack.c.bf16 %v1907, %v1903
      %v1926 = vpack.c.bf16 %v1909, %v1905
      %v1927 = vtanh.bf16.pop %v1911
      %v1928 = vtanh.bf16.pop %v1912
      %v1929 = vtanh.bf16.pop %v1913
      %v1930 = vtanh.bf16.pop %v1914
      %v1931 = vtanh.bf16.pop %v1915
      %v1932 = vtanh.bf16.pop %v1916
      %v1933 = vtanh.bf16.pop %v1917
      %v1934 = vtanh.bf16.pop %v1918
      %v1935 = vtanh.bf16.pop %v1919
      %v1936 = vtanh.bf16.pop %v1920
      %v1937 = vtanh.bf16.pop %v1921
      %v1938 = vtanh.bf16.pop %v1922
      %v1939 = vtanh.bf16.pop %v1923
      %v1940 = vtanh.bf16.pop %v1924
      %v1941 = vtanh.bf16.pop %v1925
      %v1942 = vtanh.bf16.pop %v1926
      %1943 = vmatprep.subr.bf16.mxu0 %v720
      %1944 = vmatpush1.bf16.msra.mxu0 %v719
      %1945 = vmatprep.subr.bf16.mxu0 %v722
      %1946 = vmatpush1.bf16.msra.mxu0 %v721
      %1947 = vmatprep.subr.bf16.mxu0 %v724
      %1948 = vmatpush1.bf16.msra.mxu0 %v723
      %1949 = vmatprep.subr.bf16.mxu0 %v726
      %1950 = vmatpush1.bf16.msra.mxu0 %v725
      %1951 = vmatprep.subr.bf16.mxu0 %v728
      %1952 = vmatpush1.bf16.msra.mxu0 %v727
      %1953 = vmatprep.subr.bf16.mxu0 %v730
      %1954 = vmatpush1.bf16.msra.mxu0 %v729
      %1955 = vmatprep.subr.bf16.mxu0 %v732
      %1956 = vmatpush1.bf16.msra.mxu0 %v731
      %1957 = vmatprep.subr.bf16.mxu0 %v734
      %1958 = vmatpush1.bf16.msra.mxu0 %v733
      %1959 = vmatprep.subr.bf16.mxu0 %v736
      %1960 = vmatpush1.bf16.msra.mxu0 %v735
      %1961 = vmatprep.subr.bf16.mxu0 %v738
      %1962 = vmatpush1.bf16.msra.mxu0 %v737
      %1963 = vmatprep.subr.bf16.mxu0 %v740
      %1964 = vmatpush1.bf16.msra.mxu0 %v739
      %1965 = vmatprep.subr.bf16.mxu0 %v742
      %1966 = vmatpush1.bf16.msra.mxu0 %v741
      %1967 = vmatprep.subr.bf16.mxu0 %v744
      %1968 = vmatpush1.bf16.msra.mxu0 %v743
      %1969 = vmatprep.subr.bf16.mxu0 %v746
      %1970 = vmatpush1.bf16.msra.mxu0 %v745
      %1971 = vmatprep.subr.bf16.mxu0 %v748
      %1972 = vmatpush1.bf16.msra.mxu0 %v747
      %1973 = vmatprep.subr.bf16.mxu0 %v750
      %1974 = vmatpush1.bf16.msra.mxu0 %v749
      %1975 = vmatprep.mubr.bf16.mxu0 %v1928
      %1976 = vmatmul.mubr.bf16.gmra.mrb[0].mxu0 %v1927
      %v1977 = vpop.f32.mrb[0].mxu0
      %v1978 = vadd.f32 %v616, %v1977
      %v1979 = vpop.f32.mrb[0].mxu0
      %v1980 = vadd.f32 %v620, %v1979
      %v1981 = vpop.f32.mrb[0].mxu0
      %v1982 = vadd.f32 %v616, %v1981
      %v1983 = vpop.f32.mrb[0].mxu0
      %v1984 = vadd.f32 %v620, %v1983
      %1985 = vmatprep.mubr.bf16.mxu0 %v1930
      %1986 = vmatmul.mubr.bf16.gmra.mrb[0].mxu0 %v1929
      %v1987 = vpop.f32.mrb[0].mxu0
      %v1988 = vadd.f32 %v616, %v1987
      %v1989 = vpop.f32.mrb[0].mxu0
      %v1990 = vadd.f32 %v620, %v1989
      %v1991 = vpop.f32.mrb[0].mxu0
      %v1992 = vadd.f32 %v616, %v1991
      %v1993 = vpop.f32.mrb[0].mxu0
      %v1994 = vadd.f32 %v620, %v1993
      %1995 = vmatprep.mubr.bf16.mxu0 %v1932
      %1996 = vmatmul.mubr.bf16.gmra.mrb[0].mxu0 %v1931
      %v1997 = vpop.f32.mrb[0].mxu0
      %v1998 = vadd.f32 %v616, %v1997
      %v1999 = vpop.f32.mrb[0].mxu0
      %v2000 = vadd.f32 %v620, %v1999
      %v2001 = vpop.f32.mrb[0].mxu0
      %v2002 = vadd.f32 %v616, %v2001
      %v2003 = vpop.f32.mrb[0].mxu0
      %v2004 = vadd.f32 %v620, %v2003
      %2005 = vmatprep.mubr.bf16.mxu0 %v1934
      %2006 = vmatmul.mubr.bf16.gmra.mrb[0].mxu0 %v1933
      %v2007 = vpop.f32.mrb[0].mxu0
      %v2008 = vadd.f32 %v616, %v2007
      %v2009 = vpop.f32.mrb[0].mxu0
      %v2010 = vadd.f32 %v620, %v2009
      %v2011 = vpop.f32.mrb[0].mxu0
      %v2012 = vadd.f32 %v616, %v2011
      %v2013 = vpop.f32.mrb[0].mxu0
      %v2014 = vadd.f32 %v620, %v2013
      %2015 = vmatprep.mubr.bf16.mxu0 %v1936
      %2016 = vmatmul.mubr.bf16.gmra.mrb[0].mxu0 %v1935
      %v2017 = vpop.f32.mrb[0].mxu0
      %v2018 = vadd.f32 %v616, %v2017
      %v2019 = vpop.f32.mrb[0].mxu0
      %v2020 = vadd.f32 %v620, %v2019
      %v2021 = vpop.f32.mrb[0].mxu0
      %v2022 = vadd.f32 %v616, %v2021
      %v2023 = vpop.f32.mrb[0].mxu0
      %v2024 = vadd.f32 %v620, %v2023
      %2025 = vmatprep.mubr.bf16.mxu0 %v1938
      %2026 = vmatmul.mubr.bf16.gmra.mrb[0].mxu0 %v1937
      %v2027 = vpop.f32.mrb[0].mxu0
      %v2028 = vadd.f32 %v616, %v2027
      %v2029 = vpop.f32.mrb[0].mxu0
      %v2030 = vadd.f32 %v620, %v2029
      %v2031 = vpop.f32.mrb[0].mxu0
      %v2032 = vadd.f32 %v616, %v2031
      %v2033 = vpop.f32.mrb[0].mxu0
      %v2034 = vadd.f32 %v620, %v2033
      %2035 = vmatprep.mubr.bf16.mxu0 %v1940
      %2036 = vmatmul.mubr.bf16.gmra.mrb[0].mxu0 %v1939
      %v2037 = vpop.f32.mrb[0].mxu0
      %v2038 = vadd.f32 %v616, %v2037
      %v2039 = vpop.f32.mrb[0].mxu0
      %v2040 = vadd.f32 %v620, %v2039
      %v2041 = vpop.f32.mrb[0].mxu0
      %v2042 = vadd.f32 %v616, %v2041
      %v2043 = vpop.f32.mrb[0].mxu0
      %v2044 = vadd.f32 %v620, %v2043
      %2045 = vmatprep.mubr.bf16.mxu0 %v1942
      %2046 = vmatmul.mubr.bf16.gmra.mrb[0].mxu0 %v1941
      %v2047 = vpop.f32.mrb[0].mxu0
      %v2048 = vadd.f32 %v616, %v2047
      %v2049 = vpop.f32.mrb[0].mxu0
      %v2050 = vadd.f32 %v620, %v2049
      %v2051 = vpop.f32.mrb[0].mxu0
      %v2052 = vadd.f32 %v616, %v2051
      %v2053 = vpop.f32.mrb[0].mxu0
      %v2054 = vadd.f32 %v620, %v2053
      %2055 = vdwg.mxu0
      %v2056 = vpack.c.bf16 %v1982, %v1978
      %v2057 = vpack.c.bf16 %v1984, %v1980
      %v2058 = vpack.c.bf16 %v1992, %v1988
      %v2059 = vpack.c.bf16 %v1994, %v1990
      %v2060 = vpack.c.bf16 %v2002, %v1998
      %v2061 = vpack.c.bf16 %v2004, %v2000
      %v2062 = vpack.c.bf16 %v2012, %v2008
      %v2063 = vpack.c.bf16 %v2014, %v2010
      %v2064 = vpack.c.bf16 %v2022, %v2018
      %v2065 = vpack.c.bf16 %v2024, %v2020
      %v2066 = vpack.c.bf16 %v2032, %v2028
      %v2067 = vpack.c.bf16 %v2034, %v2030
      %v2068 = vpack.c.bf16 %v2042, %v2038
      %v2069 = vpack.c.bf16 %v2044, %v2040
      %v2070 = vpack.c.bf16 %v2052, %v2048
      %v2071 = vpack.c.bf16 %v2054, %v2050
      %v2072 = vtanh.bf16.pop %v2056
      %v2073 = vtanh.bf16.pop %v2057
      %v2074 = vtanh.bf16.pop %v2058
      %v2075 = vtanh.bf16.pop %v2059
      %v2076 = vtanh.bf16.pop %v2060
      %v2077 = vtanh.bf16.pop %v2061
      %v2078 = vtanh.bf16.pop %v2062
      %v2079 = vtanh.bf16.pop %v2063
      %v2080 = vtanh.bf16.pop %v2064
      %v2081 = vtanh.bf16.pop %v2065
      %v2082 = vtanh.bf16.pop %v2066
      %v2083 = vtanh.bf16.pop %v2067
      %v2084 = vtanh.bf16.pop %v2068
      %v2085 = vtanh.bf16.pop %v2069
      %v2086 = vtanh.bf16.pop %v2070
      %v2087 = vtanh.bf16.pop %v2071
      %v2088 = vstv %s370
      %v2121 = vunpack.c.l.b16 %v338
      %v2122 = vunpack.c.l.b16 %v339
      %v2123 = vunpack.c.l.b16 %v340
      %v2124 = vunpack.c.l.b16 %v341
      %v2125 = vunpack.c.l.b16 %v342
      %v2126 = vunpack.c.l.b16 %v343
      %v2127 = vunpack.c.l.b16 %v344
      %v2128 = vunpack.c.l.b16 %v345
      %v2129 = vunpack.c.l.b16 %v346
      %v2130 = vunpack.c.l.b16 %v347
      %v2131 = vunpack.c.l.b16 %v348
      %v2132 = vunpack.c.l.b16 %v349
      %v2133 = vunpack.c.l.b16 %v350
      %v2134 = vunpack.c.l.b16 %v351
      %v2135 = vunpack.c.l.b16 %v352
      %v2136 = vunpack.c.l.b16 %v353
      %v2137 = vunpack.c.l.b16 %v354
      %v2138 = vunpack.c.l.b16 %v355
      %v2139 = vunpack.c.l.b16 %v356
      %v2140 = vunpack.c.l.b16 %v357
      %v2141 = vunpack.c.l.b16 %v358
      %v2142 = vunpack.c.l.b16 %v359
      %v2143 = vunpack.c.l.b16 %v360
      %v2144 = vunpack.c.l.b16 %v361
      %v2145 = vunpack.c.l.b16 %v362
      %v2146 = vunpack.c.l.b16 %v363
      %v2147 = vunpack.c.l.b16 %v364
      %v2148 = vunpack.c.l.b16 %v365
      %v2149 = vunpack.c.l.b16 %v366
      %v2150 = vunpack.c.l.b16 %v367
      %v2151 = vunpack.c.l.b16 %v368
      %v2152 = vunpack.c.l.b16 %v369
      %v2153 = vpack.c.b16 %v2122, %v2121
      %v2154 = vpack.c.b16 %v2124, %v2123
      %v2155 = vpack.c.b16 %v2126, %v2125
      %v2156 = vpack.c.b16 %v2128, %v2127
      %v2157 = vpack.c.b16 %v2130, %v2129
      %v2158 = vpack.c.b16 %v2132, %v2131
      %v2159 = vpack.c.b16 %v2134, %v2133
      %v2160 = vpack.c.b16 %v2136, %v2135
      %v2161 = vpack.c.b16 %v2138, %v2137
      %v2162 = vpack.c.b16 %v2140, %v2139
      %v2163 = vpack.c.b16 %v2142, %v2141
      %v2164 = vpack.c.b16 %v2144, %v2143
      %v2165 = vpack.c.b16 %v2146, %v2145
      %v2166 = vpack.c.b16 %v2148, %v2147
      %v2167 = vpack.c.b16 %v2150, %v2149
      %v2168 = vpack.c.b16 %v2152, %v2151
      %2185 = vmatprep.subr.bf16.mxu0 0
      %2186 = vmatpush1.bf16.msra.mxu0 %v2153
      %2187 = vmatprep.subr.bf16.mxu0 0
      %2188 = vmatpush1.bf16.msra.mxu0 %v2154
      %2189 = vmatprep.subr.bf16.mxu0 0
      %2190 = vmatpush1.bf16.msra.mxu0 %v2155
      %2191 = vmatprep.subr.bf16.mxu0 0
      %2192 = vmatpush1.bf16.msra.mxu0 %v2156
      %2193 = vmatprep.subr.bf16.mxu0 0
      %2194 = vmatpush1.bf16.msra.mxu0 %v2157
      %2195 = vmatprep.subr.bf16.mxu0 0
      %2196 = vmatpush1.bf16.msra.mxu0 %v2158
      %2197 = vmatprep.subr.bf16.mxu0 0
      %2198 = vmatpush1.bf16.msra.mxu0 %v2159
      %2199 = vmatprep.subr.bf16.mxu0 0
      %2200 = vmatpush1.bf16.msra.mxu0 %v2160
      %2201 = vmatprep.subr.bf16.mxu0 0
      %2202 = vmatpush1.bf16.msra.mxu0 %v2161
      %2203 = vmatprep.subr.bf16.mxu0 0
      %2204 = vmatpush1.bf16.msra.mxu0 %v2162
      %2205 = vmatprep.subr.bf16.mxu0 0
      %2206 = vmatpush1.bf16.msra.mxu0 %v2163
      %2207 = vmatprep.subr.bf16.mxu0 0
      %2208 = vmatpush1.bf16.msra.mxu0 %v2164
      %2209 = vmatprep.subr.bf16.mxu0 0
      %2210 = vmatpush1.bf16.msra.mxu0 %v2165
      %2211 = vmatprep.subr.bf16.mxu0 0
      %2212 = vmatpush1.bf16.msra.mxu0 %v2166
      %2213 = vmatprep.subr.bf16.mxu0 0
      %2214 = vmatpush1.bf16.msra.mxu0 %v2167
      %2215 = vmatprep.subr.bf16.mxu0 0
      %2216 = vmatpush1.bf16.msra.mxu0 %v2168
      %2217 = vmatprep.mubr.bf16.mxu0 %v2073
      %2218 = vmatmul.mubr.bf16.gmra.mrb[0].mxu0 %v2072
      %v2219 = vpop.f32.mrb[0].mxu0
      %v2220 = vadd.f32 %v2088, %v2219
      %v2221 = vpop.f32.mrb[0].mxu0
      %v2222 = vpop.f32.mrb[0].mxu0
      %v2223 = vadd.f32 %v2088, %v2222
      %v2224 = vpop.f32.mrb[0].mxu0
      %2225 = vmatprep.mubr.bf16.mxu0 %v2075
      %2226 = vmatmul.mubr.bf16.gmra.mrb[0].mxu0 %v2074
      %v2227 = vpop.f32.mrb[0].mxu0
      %v2228 = vadd.f32 %v2088, %v2227
      %v2229 = vpop.f32.mrb[0].mxu0
      %v2230 = vpop.f32.mrb[0].mxu0
      %v2231 = vadd.f32 %v2088, %v2230
      %v2232 = vpop.f32.mrb[0].mxu0
      %2233 = vmatprep.mubr.bf16.mxu0 %v2077
      %2234 = vmatmul.mubr.bf16.gmra.mrb[0].mxu0 %v2076
      %v2235 = vpop.f32.mrb[0].mxu0
      %v2236 = vadd.f32 %v2088, %v2235
      %v2237 = vpop.f32.mrb[0].mxu0
      %v2238 = vpop.f32.mrb[0].mxu0
      %v2239 = vadd.f32 %v2088, %v2238
      %v2240 = vpop.f32.mrb[0].mxu0
      %2241 = vmatprep.mubr.bf16.mxu0 %v2079
      %2242 = vmatmul.mubr.bf16.gmra.mrb[0].mxu0 %v2078
      %v2243 = vpop.f32.mrb[0].mxu0
      %v2244 = vadd.f32 %v2088, %v2243
      %v2245 = vpop.f32.mrb[0].mxu0
      %v2246 = vpop.f32.mrb[0].mxu0
      %v2247 = vadd.f32 %v2088, %v2246
      %v2248 = vpop.f32.mrb[0].mxu0
      %2249 = vmatprep.mubr.bf16.mxu0 %v2081
      %2250 = vmatmul.mubr.bf16.gmra.mrb[0].mxu0 %v2080
      %v2251 = vpop.f32.mrb[0].mxu0
      %v2252 = vadd.f32 %v2088, %v2251
      %v2253 = vpop.f32.mrb[0].mxu0
      %v2254 = vpop.f32.mrb[0].mxu0
      %v2255 = vadd.f32 %v2088, %v2254
      %v2256 = vpop.f32.mrb[0].mxu0
      %2257 = vmatprep.mubr.bf16.mxu0 %v2083
      %2258 = vmatmul.mubr.bf16.gmra.mrb[0].mxu0 %v2082
      %v2259 = vpop.f32.mrb[0].mxu0
      %v2260 = vadd.f32 %v2088, %v2259
      %v2261 = vpop.f32.mrb[0].mxu0
      %v2262 = vpop.f32.mrb[0].mxu0
      %v2263 = vadd.f32 %v2088, %v2262
      %v2264 = vpop.f32.mrb[0].mxu0
      %2265 = vmatprep.mubr.bf16.mxu0 %v2085
      %2266 = vmatmul.mubr.bf16.gmra.mrb[0].mxu0 %v2084
      %v2267 = vpop.f32.mrb[0].mxu0
      %v2268 = vadd.f32 %v2088, %v2267
      %v2269 = vpop.f32.mrb[0].mxu0
      %v2270 = vpop.f32.mrb[0].mxu0
      %v2271 = vadd.f32 %v2088, %v2270
      %v2272 = vpop.f32.mrb[0].mxu0
      %2273 = vmatprep.mubr.bf16.mxu0 %v2087
      %2274 = vmatmul.mubr.bf16.gmra.mrb[0].mxu0 %v2086
      %v2275 = vpop.f32.mrb[0].mxu0
      %v2276 = vadd.f32 %v2088, %v2275
      %v2277 = vpop.f32.mrb[0].mxu0
      %v2278 = vpop.f32.mrb[0].mxu0
      %v2279 = vadd.f32 %v2088, %v2278
      %v2280 = vpop.f32.mrb[0].mxu0
      %2281 = vdwg.mxu0
      %vm2282 = vcmask 64512
      %2283 = vst.msk [vmem:[%s281] sm:$0xff] %vm2282, %v2220
      %2284 = vst.msk [vmem:[%s281 + $0x8] sm:$0xff] %vm2282, %v2223
      %2285 = vst.msk [vmem:[%s281 + $0x10] sm:$0xff] %vm2282, %v2228
      %2286 = vst.msk [vmem:[%s281 + $0x18] sm:$0xff] %vm2282, %v2231
      %2287 = vst.msk [vmem:[%s281 + $0x20] sm:$0xff] %vm2282, %v2236
      %2288 = vst.msk [vmem:[%s281 + $0x28] sm:$0xff] %vm2282, %v2239
      %2289 = vst.msk [vmem:[%s281 + $0x30] sm:$0xff] %vm2282, %v2244
      %2290 = vst.msk [vmem:[%s281 + $0x38] sm:$0xff] %vm2282, %v2247
      %2291 = vst.msk [vmem:[%s281 + $0x40] sm:$0xff] %vm2282, %v2252
      %2292 = vst.msk [vmem:[%s281 + $0x48] sm:$0xff] %vm2282, %v2255
      %2293 = vst.msk [vmem:[%s281 + $0x50] sm:$0xff] %vm2282, %v2260
      %2294 = vst.msk [vmem:[%s281 + $0x58] sm:$0xff] %vm2282, %v2263
      %2295 = vst.msk [vmem:[%s281 + $0x60] sm:$0xff] %vm2282, %v2268
      %2296 = vst.msk [vmem:[%s281 + $0x68] sm:$0xff] %vm2282, %v2271
      %2297 = vst.msk [vmem:[%s281 + $0x70] sm:$0xff] %vm2282, %v2276
      %2298 = vst.msk [vmem:[%s281 + $0x78] sm:$0xff] %vm2282, %v2279
      %s2299 = smul.u32 16, %s19
      %p2300 = scmp.lt.s32.totalorder %s2299, 31
      %s2301 = scalar_select %p2300, %s2299, 31
      %s2302 = smul.addr %s2301, 8
      %s2303 = scalar_lea.vmem %s7, %s2302
      // Predicated region
      $region49: #{tpu_custom_call.1} parent=47 // pred_check
        %p2304 = pneg %p189
      $region50: #{tpu_custom_call.1} parent=47 // pred_check_branch
        %2306 = sbr.rel (%p2304) target = $region52
      $region51: #{tpu_custom_call.1} parent=47 // pred_region
        %s2307 = smul.u32 16, %s19
      $region52: #{tpu_custom_call.1} parent=47 // pred_fallthru
        _
    $region48: #{tpu_custom_call.1} parent=5 // pred_fallthru
      _
    %p2308 = scmp.le.s32.totalorder 2, %s14
    // Predicated region
    $region53: #{tpu_custom_call.1} parent=5 // pred_check
      %p2309 = pneg %p2308
    $region54: #{tpu_custom_call.1} parent=5 // pred_check_branch
      %2311 = sbr.rel (%p2309) target = $region56
    $region55: #{tpu_custom_call.1} parent=5 // pred_region
      %s2312 = ssub.s32 %s14, 2
      // Predicated region
      $region57: #{tpu_custom_call.1} parent=55 // pred_check
        %p2313 = pneg %p195
      $region58: #{tpu_custom_call.1} parent=55 // pred_check_branch
        %2315 = sbr.rel (%p2313) target = $region60
      $region59: #{tpu_custom_call.1} parent=55 // pred_region
        %s2316 = smul.u32 16, %s20
        %p2317 = scmp.lt.s32.totalorder %s2316, 31
        %s2318 = scalar_select %p2317, %s2316, 31
        %s2319 = smul.addr %s2318, 8
        %s2320 = scalar_lea.vmem %s7, %s2319
      $region60: #{tpu_custom_call.1} parent=55 // pred_fallthru
        _
    $region56: #{tpu_custom_call.1} parent=5 // pred_fallthru
      _
  $region6: #{tpu_custom_call.1} parent=0 // loop_footer
    %s18 = sadd.s32 1, %s14
  $region7: #{tpu_custom_call.1} parent=0 // loop_footer_branch
    %13 = sbr.rel target = $region3
  $region8: #{tpu_custom_call.1} parent=0 // loop_exit
    _

</llo_original>
